<compile_context>
chip_gen: v7x
topology: tpu7x:2x2x1
jax: 0.10.0
libtpu: 0.0.40
codegen_flags: <defaults>
</compile_context>

<pallas_src>
import math
import functools

import jax
import jax.numpy as jnp
from jax import lax
from jax.experimental import pallas as pl
from jax.experimental.pallas import tpu as pltpu


def _layer_norm(v, g, b, eps=1e-6):
    mu = jnp.mean(v, axis=-1, keepdims=True)
    var = jnp.mean(jnp.square(v - mu), axis=-1, keepdims=True)
    return (v - mu) * lax.rsqrt(var + eps) * g + b


def _encoder_kernel(num_heads, compute_dtype,
                    x_ref, bias_ref,
                    ln1_g, ln1_b,
                    wqkv, bqkv, wo, bo,
                    ln2_g, ln2_b,
                    w1, b1, w2, b2,
                    lnf_g, lnf_b,
                    out_ref):
    """One grid step == `Bb` batch elements. Everything below runs in VMEM."""
    Bb, T, H = x_ref.shape
    hd = H // num_heads
    cdt = compute_dtype

    def cast(a):
        return a if a.dtype == cdt else a.astype(cdt)

    x = x_ref[...].reshape(Bb * T, H)            # (Bb*T, H) f32 activations
    bias = bias_ref[...]                         # (Bb, 1, T) additive key-padding bias
    # Hoist the broadcast out of the head loop (broadcast_in_dim is not CSE'd).
    bias_full = jnp.broadcast_to(bias, (Bb, T, T))

    # Grid-invariant weights (already in compute dtype, cast in the wrapper).
    wqkv_v, wo_v = wqkv[...], wo[...]
    w1_v, w2_v = w1[...], w2[...]

    # ---- self-attention sub-layer (pre-LayerNorm) ----
    xn = cast(_layer_norm(x, ln1_g[...], ln1_b[...]))
    # Fused QKV projection; 1/sqrt(head_dim) folded into the Q slice by the wrapper.
    qkv = jnp.dot(xn, wqkv_v, preferred_element_type=jnp.float32) + bqkv[...]
    qkv_c = cast(qkv)                            # (Bb*T, 3H)

    attn_out = jnp.zeros((Bb * T, H), jnp.float32)
    for h in range(num_heads):                   # static unrolled head loop
        q_sl = slice(h * hd, (h + 1) * hd)
        k_sl = slice(H + h * hd, H + (h + 1) * hd)
        v_sl = slice(2 * H + h * hd, 2 * H + (h + 1) * hd)
        qh = qkv_c[:, q_sl].reshape(Bb, T, hd)
        kh = qkv_c[:, k_sl].reshape(Bb, T, hd)
        vh = qkv_c[:, v_sl].reshape(Bb, T, hd)
        # transpose absorbed into the contraction (no explicit kh.T / XLU transpose)
        scores = jnp.einsum('bqd,bkd->bqk', qh, kh,
                            preferred_element_type=jnp.float32)      # (Bb, T, T)
        scores = scores + bias_full                                  # finite mask bias
        m = jnp.max(scores, axis=-1, keepdims=True)
        p = jnp.exp(scores - m)
        attn = p * pl.reciprocal(jnp.sum(p, axis=-1, keepdims=True), approx=True)
        ctx = jnp.einsum('bqk,bkd->bqd', cast(attn), vh,
                         preferred_element_type=jnp.float32)         # (Bb, T, hd)
        # Accumulate straight into the output projection: no lane-axis concat.
        attn_out = attn_out + jnp.dot(cast(ctx.reshape(Bb * T, hd)), wo_v[q_sl, :],
                                      preferred_element_type=jnp.float32)

    h1 = attn_out + bo[...] + x                  # residual; dropout = identity (eval)

    # ---- position-wise feed-forward sub-layer (pre-LayerNorm) ----
    hn = cast(_layer_norm(h1, ln2_g[...], ln2_b[...]))
    ff = jnp.maximum(jnp.dot(hn, w1_v, preferred_element_type=jnp.float32) + b1[...], 0.0)
    ff = jnp.dot(cast(ff), w2_v, preferred_element_type=jnp.float32) + b2[...]
    o = ff + h1

    # ---- final encoder LayerNorm ----
    out_ref[...] = _layer_norm(o, lnf_g[...], lnf_b[...]).reshape(Bb, T, H).astype(out_ref.dtype)


def _pick_block_batch(B, T, H, F):
    """Largest batch-block (divisor of B) fitting an ~8 MiB activation budget while
    keeping >= 2 grid steps so both v7x TensorCores stay busy (free on v5e/v6e)."""
    per_elem = 4 * (10 * T * H + 2 * T * T + 2 * T * F)   # rough f32 working set / element
    cap = max(1, (8 * 1024 * 1024) // max(per_elem, 1))
    best = 1
    for d in range(1, B + 1):
        if B % d == 0 and d <= cap and (B // d >= 2 or B == 1):
            best = d
    return best


def transformer_encoder_forward(embed_src, src_length, mask_bool, params, num_heads,
                                *, block_batch=None, use_bf16=False):
    """Mirrors TransformerEncoder.forward; src_length is unused there as well."""
    del src_length
    B, T, H = embed_src.shape
    F = params["w1"].shape[-1]
    assert H % num_heads == 0
    hd = H // num_heads

    Bb = block_batch if block_batch is not None else _pick_block_batch(B, T, H, F)
    assert B % Bb == 0, "block_batch must divide the batch size"

    mm_dtype = jnp.bfloat16 if use_bf16 else jnp.float32

    def wcast(w):
        return w.astype(mm_dtype)

    # Fold the 1/sqrt(head_dim) attention scale into the query projection, and fuse
    # the Q/K/V projections into one (H, 3H) matmul.
    scale = 1.0 / math.sqrt(hd)
    wqkv = jnp.concatenate([params["wq"] * scale, params["wk"], params["wv"]], axis=-1)
    bqkv = jnp.concatenate([params["bq"] * scale, params["bk"], params["bv"]], axis=-1)

    weight_args = [
        params["ln1_g"], params["ln1_b"],
        wcast(wqkv), bqkv,
        wcast(params["wo"]), params["bo"],
        params["ln2_g"], params["ln2_b"],
        wcast(params["w1"]), params["b1"],
        wcast(params["w2"]), params["b2"],
        params["lnf_g"], params["lnf_b"],
    ]

    # Additive key-padding bias: 0 where valid, -1e30 where padded.  Finite, so a
    # fully-masked row degrades to a uniform distribution instead of NaN.
    mask_bias = jnp.where(mask_bool, 0.0, -1e30).astype(jnp.float32)   # (B, 1, T)

    def full_spec(a):
        return pl.BlockSpec(a.shape, lambda b, n=a.ndim: (0,) * n)

    in_specs = [
        pl.BlockSpec((Bb, T, H), lambda b: (b, 0, 0)),   # activations, Bb elems / step
        pl.BlockSpec((Bb, 1, T), lambda b: (b, 0, 0)),   # mask bias, Bb elems / step
    ] + [full_spec(a) for a in weight_args]

    out = pl.pallas_call(
        functools.partial(_encoder_kernel, num_heads, mm_dtype),
        out_shape=jax.ShapeDtypeStruct((B, T, H), jnp.float32),
        grid=(B // Bb,),
        in_specs=in_specs,
        out_specs=pl.BlockSpec((Bb, T, H), lambda b: (b, 0, 0)),
        compiler_params=pltpu.CompilerParams(
            dimension_semantics=("parallel",),
            vmem_limit_bytes=32 * 1024 * 1024,   # above v5e's 16 MiB scoped default
        ),
    )(embed_src.astype(jnp.float32), mask_bias, *weight_args)
    return out, None


def init_params(key, H, F):
    ks = jax.random.split(key, 18)
    def n(k, shape, s=0.05):
        return (s * jax.random.normal(k, shape)).astype(jnp.float32)
    return dict(
        ln1_g=1.0 + n(ks[0], (1, H), 0.1), ln1_b=n(ks[1], (1, H), 0.1),
        wq=n(ks[2], (H, H)), bq=n(ks[3], (1, H)),
        wk=n(ks[4], (H, H)), bk=n(ks[5], (1, H)),
        wv=n(ks[6], (H, H)), bv=n(ks[7], (1, H)),
        wo=n(ks[8], (H, H)), bo=n(ks[9], (1, H)),
        ln2_g=1.0 + n(ks[10], (1, H), 0.1), ln2_b=n(ks[11], (1, H), 0.1),
        w1=n(ks[12], (H, F)), b1=n(ks[13], (1, F)),
        w2=n(ks[14], (F, H)), b2=n(ks[15], (1, H)),
        lnf_g=1.0 + n(ks[16], (1, H), 0.1), lnf_b=n(ks[17], (1, H), 0.1),
    )


def reference_forward(embed_src, mask_bool, params, num_heads):
    """Pure-JAX reference mirroring the PyTorch eval-mode forward."""
    x = embed_src.astype(jnp.float32)
    B, T, H = x.shape
    hd = H // num_heads

    def ln(v, g, b):
        mu = v.mean(-1, keepdims=True)
        var = ((v - mu) ** 2).mean(-1, keepdims=True)
        return (v - mu) * lax.rsqrt(var + 1e-6) * g + b

    xn = ln(x, params["ln1_g"], params["ln1_b"])
    q = xn @ params["wq"] + params["bq"]
    k = xn @ params["wk"] + params["bk"]
    v = xn @ params["wv"] + params["bv"]

    def split(a):
        return a.reshape(B, T, num_heads, hd).transpose(0, 2, 1, 3)

    q, k, v = split(q) / math.sqrt(hd), split(k), split(v)
    scores = jnp.einsum("bhqd,bhkd->bhqk", q, k)
    scores = jnp.where(mask_bool[:, None, :, :], scores, -jnp.inf)
    m = scores.max(-1, keepdims=True)
    p = jnp.exp(scores - m)
    attn = p / p.sum(-1, keepdims=True)
    ctx = jnp.einsum("bhqk,bhkd->bhqd", attn, v)
    ctx = ctx.transpose(0, 2, 1, 3).reshape(B, T, H)
    h1 = ctx @ params["wo"] + params["bo"] + x
    hn = ln(h1, params["ln2_g"], params["ln2_b"])
    ff = jnp.maximum(hn @ params["w1"] + params["b1"], 0.0) @ params["w2"] + params["b2"]
    o = ff + h1
    return ln(o, params["lnf_g"], params["lnf_b"])


if __name__ == "__main__":
    B, T, H, NUM_HEADS, FF = 2, 8, 32, 4, 64   # small shapes consistent with the module

    key = jax.random.PRNGKey(0)
    kx, kp, kx2 = jax.random.split(key, 3)
    embed_src = jax.random.normal(kx, (B, T, H), jnp.float32)
    src_length = jnp.array([T, 5], jnp.int32)
    positions = jnp.arange(T)[None, :]                          # (1, T)
    mask_bool = (positions < src_length[:, None])[:, None, :]   # (B, 1, T) bool

    params = init_params(kp, H, FF)

    # --- run 1: f32 MXU operands, auto block_batch (grid of 2 -> megacore-friendly) ---
    out, hidden = transformer_encoder_forward(embed_src, src_length, mask_bool,
                                              params, NUM_HEADS)
    out = jax.block_until_ready(out)
    assert hidden is None
    assert out.shape == (B, T, H)
    ref = reference_forward(embed_src, mask_bool, params, NUM_HEADS)
    err = float(jnp.max(jnp.abs(out - ref)))
    assert err < 2e-3, f"f32 max abs err {err}"

    # --- run 2: multi-element batch blocks + bf16 MXU operands (v6e/v7x fast path) ---
    B2 = 4
    embed2 = jax.random.normal(kx2, (B2, T, H), jnp.float32)
    len2 = jnp.array([T, 6, 3, T], jnp.int32)
    mask2 = (positions < len2[:, None])[:, None, :]
    out2, _ = transformer_encoder_forward(embed2, len2, mask2, params, NUM_HEADS,
                                          block_batch=2, use_bf16=True)
    out2 = jax.block_until_ready(out2)
    ref2 = reference_forward(embed2, mask2, params, NUM_HEADS)
    err2 = float(jnp.max(jnp.abs(out2 - ref2)))
    assert err2 < 7.5e-2, f"bf16 max abs err {err2}"

    print("KERNEL_OK")
</pallas_src>

<mosaic_0001>
module attributes {stable_mosaic.version = 11 : i64} {
  func.func @_encoder_kernel(%arg0: i32, %arg1: memref<1x8x32xf32, #tpu.memory_space<vmem>>, %arg2: memref<1x1x8xf32, #tpu.memory_space<vmem>>, %arg3: memref<1x32xf32, #tpu.memory_space<vmem>>, %arg4: memref<1x32xf32, #tpu.memory_space<vmem>>, %arg5: memref<32x96xf32, #tpu.memory_space<vmem>>, %arg6: memref<1x96xf32, #tpu.memory_space<vmem>>, %arg7: memref<32x32xf32, #tpu.memory_space<vmem>>, %arg8: memref<1x32xf32, #tpu.memory_space<vmem>>, %arg9: memref<1x32xf32, #tpu.memory_space<vmem>>, %arg10: memref<1x32xf32, #tpu.memory_space<vmem>>, %arg11: memref<32x64xf32, #tpu.memory_space<vmem>>, %arg12: memref<1x64xf32, #tpu.memory_space<vmem>>, %arg13: memref<64x32xf32, #tpu.memory_space<vmem>>, %arg14: memref<1x32xf32, #tpu.memory_space<vmem>>, %arg15: memref<1x32xf32, #tpu.memory_space<vmem>>, %arg16: memref<1x32xf32, #tpu.memory_space<vmem>>, %arg17: memref<1x8x32xf32, #tpu.memory_space<vmem>>) attributes {dimension_semantics = [#tpu.dimension_semantics<parallel>], iteration_bounds = array<i64: 2>, scalar_prefetch = 0 : i64, scratch_operands = 0 : i64, tpu.core_type = #tpu.core_type<tc>, window_params = [{transform_indices = @transform_0, window_bounds = array<i64: 1, 8, 32>}, {transform_indices = @transform_1, window_bounds = array<i64: 1, 1, 8>}, {pipeline_mode = #tpu.pipeline_mode<synchronous>, transform_indices = @transform_2, window_bounds = array<i64: 1, 32>}, {pipeline_mode = #tpu.pipeline_mode<synchronous>, transform_indices = @transform_3, window_bounds = array<i64: 1, 32>}, {pipeline_mode = #tpu.pipeline_mode<synchronous>, transform_indices = @transform_4, window_bounds = array<i64: 32, 96>}, {pipeline_mode = #tpu.pipeline_mode<synchronous>, transform_indices = @transform_5, window_bounds = array<i64: 1, 96>}, {pipeline_mode = #tpu.pipeline_mode<synchronous>, transform_indices = @transform_6, window_bounds = array<i64: 32, 32>}, {pipeline_mode = #tpu.pipeline_mode<synchronous>, transform_indices = @transform_7, window_bounds = array<i64: 1, 32>}, {pipeline_mode = #tpu.pipeline_mode<synchronous>, transform_indices = @transform_8, window_bounds = array<i64: 1, 32>}, {pipeline_mode = #tpu.pipeline_mode<synchronous>, transform_indices = @transform_9, window_bounds = array<i64: 1, 32>}, {pipeline_mode = #tpu.pipeline_mode<synchronous>, transform_indices = @transform_10, window_bounds = array<i64: 32, 64>}, {pipeline_mode = #tpu.pipeline_mode<synchronous>, transform_indices = @transform_11, window_bounds = array<i64: 1, 64>}, {pipeline_mode = #tpu.pipeline_mode<synchronous>, transform_indices = @transform_12, window_bounds = array<i64: 64, 32>}, {pipeline_mode = #tpu.pipeline_mode<synchronous>, transform_indices = @transform_13, window_bounds = array<i64: 1, 32>}, {pipeline_mode = #tpu.pipeline_mode<synchronous>, transform_indices = @transform_14, window_bounds = array<i64: 1, 32>}, {pipeline_mode = #tpu.pipeline_mode<synchronous>, transform_indices = @transform_15, window_bounds = array<i64: 1, 32>}, {transform_indices = @transform_16, window_bounds = array<i64: 1, 8, 32>}]} {
    %c0 = arith.constant 0 : index
    %c0_0 = arith.constant 0 : index
    %c0_1 = arith.constant 0 : index
    %0 = vector.load %arg1[%c0, %c0_0, %c0_1] : memref<1x8x32xf32, #tpu.memory_space<vmem>>, vector<1x8x32xf32>
    %1 = vector.shape_cast %0 : vector<1x8x32xf32> to vector<8x32xf32>
    %c0_2 = arith.constant 0 : index
    %c0_3 = arith.constant 0 : index
    %c0_4 = arith.constant 0 : index
    %2 = vector.load %arg2[%c0_2, %c0_3, %c0_4] : memref<1x1x8xf32, #tpu.memory_space<vmem>>, vector<1x1x8xf32>
    %3 = vector.shape_cast %2 : vector<1x1x8xf32> to vector<1x1x8xf32>
    %4 = vector.broadcast %3 : vector<1x1x8xf32> to vector<1x8x8xf32>
    %c0_5 = arith.constant 0 : index
    %c0_6 = arith.constant 0 : index
    %5 = vector.load %arg5[%c0_5, %c0_6] : memref<32x96xf32, #tpu.memory_space<vmem>>, vector<32x96xf32>
    %c0_7 = arith.constant 0 : index
    %c0_8 = arith.constant 0 : index
    %6 = vector.load %arg7[%c0_7, %c0_8] : memref<32x32xf32, #tpu.memory_space<vmem>>, vector<32x32xf32>
    %c0_9 = arith.constant 0 : index
    %c0_10 = arith.constant 0 : index
    %7 = vector.load %arg11[%c0_9, %c0_10] : memref<32x64xf32, #tpu.memory_space<vmem>>, vector<32x64xf32>
    %c0_11 = arith.constant 0 : index
    %c0_12 = arith.constant 0 : index
    %8 = vector.load %arg13[%c0_11, %c0_12] : memref<64x32xf32, #tpu.memory_space<vmem>>, vector<64x32xf32>
    %c0_13 = arith.constant 0 : index
    %c0_14 = arith.constant 0 : index
    %9 = vector.load %arg3[%c0_13, %c0_14] : memref<1x32xf32, #tpu.memory_space<vmem>>, vector<1x32xf32>
    %c0_15 = arith.constant 0 : index
    %c0_16 = arith.constant 0 : index
    %10 = vector.load %arg4[%c0_15, %c0_16] : memref<1x32xf32, #tpu.memory_space<vmem>>, vector<1x32xf32>
    %cst = arith.constant dense<0.000000e+00> : vector<8xf32>
    %11 = vector.multi_reduction <add>, %1, %cst [1] : vector<8x32xf32> to vector<8xf32>
    %12 = vector.shape_cast %11 : vector<8xf32> to vector<8x1xf32>
    %cst_17 = arith.constant 3.200000e+01 : f32
    %13 = vector.broadcast %cst_17 : f32 to vector<8x1xf32>
    %14 = arith.divf %12, %13 : vector<8x1xf32>
    %15 = vector.broadcast %14 : vector<8x1xf32> to vector<8x32xf32>
    %16 = arith.subf %1, %15 : vector<8x32xf32>
    %17 = arith.mulf %16, %16 : vector<8x32xf32>
    %cst_18 = arith.constant dense<0.000000e+00> : vector<8xf32>
    %18 = vector.multi_reduction <add>, %17, %cst_18 [1] : vector<8x32xf32> to vector<8xf32>
    %19 = vector.shape_cast %18 : vector<8xf32> to vector<8x1xf32>
    %cst_19 = arith.constant 3.200000e+01 : f32
    %20 = vector.broadcast %cst_19 : f32 to vector<8x1xf32>
    %21 = arith.divf %19, %20 : vector<8x1xf32>
    %22 = vector.broadcast %14 : vector<8x1xf32> to vector<8x32xf32>
    %23 = arith.subf %1, %22 : vector<8x32xf32>
    %cst_20 = arith.constant 9.99999997E-7 : f32
    %24 = vector.broadcast %cst_20 : f32 to vector<8x1xf32>
    %25 = arith.addf %21, %24 : vector<8x1xf32>
    %26 = math.rsqrt %25 : vector<8x1xf32>
    %27 = vector.broadcast %26 : vector<8x1xf32> to vector<8x32xf32>
    %28 = arith.mulf %23, %27 : vector<8x32xf32>
    %29 = vector.broadcast %9 : vector<1x32xf32> to vector<8x32xf32>
    %30 = arith.mulf %28, %29 : vector<8x32xf32>
    %31 = vector.broadcast %10 : vector<1x32xf32> to vector<8x32xf32>
    %32 = arith.addf %30, %31 : vector<8x32xf32>
    %cst_21 = arith.constant dense<0.000000e+00> : vector<8x96xf32>
    %33 = tpu.matmul %32, %5, %cst_21 {dimension_numbers = #tpu.dot_dimension_numbers<[1], [0], [0], [1], [0, 0, 1, 1], [], []>} : vector<8x32xf32>, vector<32x96xf32>, vector<8x96xf32> -> vector<8x96xf32>
    %c0_22 = arith.constant 0 : index
    %c0_23 = arith.constant 0 : index
    %34 = vector.load %arg6[%c0_22, %c0_23] : memref<1x96xf32, #tpu.memory_space<vmem>>, vector<1x96xf32>
    %35 = vector.broadcast %34 : vector<1x96xf32> to vector<8x96xf32>
    %36 = arith.addf %33, %35 : vector<8x96xf32>
    %cst_24 = arith.constant 0.000000e+00 : f32
    %37 = vector.broadcast %cst_24 : f32 to vector<8x32xf32>
    %38 = vector.extract_strided_slice %36 {offsets = [0, 0], sizes = [8, 8], strides = [1, 1]} : vector<8x96xf32> to vector<8x8xf32>
    %39 = vector.shape_cast %38 : vector<8x8xf32> to vector<1x8x8xf32>
    %40 = vector.extract_strided_slice %36 {offsets = [0, 32], sizes = [8, 8], strides = [1, 1]} : vector<8x96xf32> to vector<8x8xf32>
    %41 = vector.shape_cast %40 : vector<8x8xf32> to vector<1x8x8xf32>
    %42 = vector.extract_strided_slice %36 {offsets = [0, 64], sizes = [8, 8], strides = [1, 1]} : vector<8x96xf32> to vector<8x8xf32>
    %43 = vector.shape_cast %42 : vector<8x8xf32> to vector<1x8x8xf32>
    "tpu.trace_start"() <{level = 10 : i32, message = "bqd,bkd->bqk"}> : () -> ()
    %cst_25 = arith.constant dense<0.000000e+00> : vector<1x8x8xf32>
    %44 = tpu.matmul %39, %41, %cst_25 {dimension_numbers = #tpu.dot_dimension_numbers<[2], [2], [1], [1], [0, 0, 0, 1, 1, 1], [0], [0]>} : vector<1x8x8xf32>, vector<1x8x8xf32>, vector<1x8x8xf32> -> vector<1x8x8xf32>
    "tpu.trace_stop"() : () -> ()
    %45 = arith.addf %44, %4 : vector<1x8x8xf32>
    %cst_26 = arith.constant dense<0xFF800000> : vector<1x8xf32>
    %46 = vector.multi_reduction <maximumf>, %45, %cst_26 [2] : vector<1x8x8xf32> to vector<1x8xf32>
    %47 = vector.shape_cast %46 : vector<1x8xf32> to vector<1x8x1xf32>
    %48 = vector.broadcast %47 : vector<1x8x1xf32> to vector<1x8x8xf32>
    %49 = arith.subf %45, %48 : vector<1x8x8xf32>
    %50 = math.exp %49 : vector<1x8x8xf32>
    %cst_27 = arith.constant dense<0.000000e+00> : vector<1x8xf32>
    %51 = vector.multi_reduction <add>, %50, %cst_27 [2] : vector<1x8x8xf32> to vector<1x8xf32>
    %52 = vector.shape_cast %51 : vector<1x8xf32> to vector<1x8x1xf32>
    %53 = tpu.reciprocal %52 {approx = true} : vector<1x8x1xf32> -> vector<1x8x1xf32>
    %54 = vector.broadcast %53 : vector<1x8x1xf32> to vector<1x8x8xf32>
    %55 = arith.mulf %50, %54 : vector<1x8x8xf32>
    "tpu.trace_start"() <{level = 10 : i32, message = "bqk,bkd->bqd"}> : () -> ()
    %cst_28 = arith.constant dense<0.000000e+00> : vector<1x8x8xf32>
    %56 = tpu.matmul %55, %43, %cst_28 {dimension_numbers = #tpu.dot_dimension_numbers<[2], [1], [1], [2], [0, 0, 0, 1, 1, 2], [0], [0]>} : vector<1x8x8xf32>, vector<1x8x8xf32>, vector<1x8x8xf32> -> vector<1x8x8xf32>
    "tpu.trace_stop"() : () -> ()
    %57 = vector.shape_cast %56 : vector<1x8x8xf32> to vector<8x8xf32>
    %58 = vector.extract_strided_slice %6 {offsets = [0, 0], sizes = [8, 32], strides = [1, 1]} : vector<32x32xf32> to vector<8x32xf32>
    %cst_29 = arith.constant dense<0.000000e+00> : vector<8x32xf32>
    %59 = tpu.matmul %57, %58, %cst_29 {dimension_numbers = #tpu.dot_dimension_numbers<[1], [0], [0], [1], [0, 0, 1, 1], [], []>} : vector<8x8xf32>, vector<8x32xf32>, vector<8x32xf32> -> vector<8x32xf32>
    %60 = arith.addf %37, %59 : vector<8x32xf32>
    %61 = vector.extract_strided_slice %36 {offsets = [0, 8], sizes = [8, 8], strides = [1, 1]} : vector<8x96xf32> to vector<8x8xf32>
    %62 = vector.shape_cast %61 : vector<8x8xf32> to vector<1x8x8xf32>
    %63 = vector.extract_strided_slice %36 {offsets = [0, 40], sizes = [8, 8], strides = [1, 1]} : vector<8x96xf32> to vector<8x8xf32>
    %64 = vector.shape_cast %63 : vector<8x8xf32> to vector<1x8x8xf32>
    %65 = vector.extract_strided_slice %36 {offsets = [0, 72], sizes = [8, 8], strides = [1, 1]} : vector<8x96xf32> to vector<8x8xf32>
    %66 = vector.shape_cast %65 : vector<8x8xf32> to vector<1x8x8xf32>
    "tpu.trace_start"() <{level = 10 : i32, message = "bqd,bkd->bqk"}> : () -> ()
    %cst_30 = arith.constant dense<0.000000e+00> : vector<1x8x8xf32>
    %67 = tpu.matmul %62, %64, %cst_30 {dimension_numbers = #tpu.dot_dimension_numbers<[2], [2], [1], [1], [0, 0, 0, 1, 1, 1], [0], [0]>} : vector<1x8x8xf32>, vector<1x8x8xf32>, vector<1x8x8xf32> -> vector<1x8x8xf32>
    "tpu.trace_stop"() : () -> ()
    %68 = arith.addf %67, %4 : vector<1x8x8xf32>
    %cst_31 = arith.constant dense<0xFF800000> : vector<1x8xf32>
    %69 = vector.multi_reduction <maximumf>, %68, %cst_31 [2] : vector<1x8x8xf32> to vector<1x8xf32>
    %70 = vector.shape_cast %69 : vector<1x8xf32> to vector<1x8x1xf32>
    %71 = vector.broadcast %70 : vector<1x8x1xf32> to vector<1x8x8xf32>
    %72 = arith.subf %68, %71 : vector<1x8x8xf32>
    %73 = math.exp %72 : vector<1x8x8xf32>
    %cst_32 = arith.constant dense<0.000000e+00> : vector<1x8xf32>
    %74 = vector.multi_reduction <add>, %73, %cst_32 [2] : vector<1x8x8xf32> to vector<1x8xf32>
    %75 = vector.shape_cast %74 : vector<1x8xf32> to vector<1x8x1xf32>
    %76 = tpu.reciprocal %75 {approx = true} : vector<1x8x1xf32> -> vector<1x8x1xf32>
    %77 = vector.broadcast %76 : vector<1x8x1xf32> to vector<1x8x8xf32>
    %78 = arith.mulf %73, %77 : vector<1x8x8xf32>
    "tpu.trace_start"() <{level = 10 : i32, message = "bqk,bkd->bqd"}> : () -> ()
    %cst_33 = arith.constant dense<0.000000e+00> : vector<1x8x8xf32>
    %79 = tpu.matmul %78, %66, %cst_33 {dimension_numbers = #tpu.dot_dimension_numbers<[2], [1], [1], [2], [0, 0, 0, 1, 1, 2], [0], [0]>} : vector<1x8x8xf32>, vector<1x8x8xf32>, vector<1x8x8xf32> -> vector<1x8x8xf32>
    "tpu.trace_stop"() : () -> ()
    %80 = vector.shape_cast %79 : vector<1x8x8xf32> to vector<8x8xf32>
    %81 = vector.extract_strided_slice %6 {offsets = [8, 0], sizes = [8, 32], strides = [1, 1]} : vector<32x32xf32> to vector<8x32xf32>
    %cst_34 = arith.constant dense<0.000000e+00> : vector<8x32xf32>
    %82 = tpu.matmul %80, %81, %cst_34 {dimension_numbers = #tpu.dot_dimension_numbers<[1], [0], [0], [1], [0, 0, 1, 1], [], []>} : vector<8x8xf32>, vector<8x32xf32>, vector<8x32xf32> -> vector<8x32xf32>
    %83 = arith.addf %60, %82 : vector<8x32xf32>
    %84 = vector.extract_strided_slice %36 {offsets = [0, 16], sizes = [8, 8], strides = [1, 1]} : vector<8x96xf32> to vector<8x8xf32>
    %85 = vector.shape_cast %84 : vector<8x8xf32> to vector<1x8x8xf32>
    %86 = vector.extract_strided_slice %36 {offsets = [0, 48], sizes = [8, 8], strides = [1, 1]} : vector<8x96xf32> to vector<8x8xf32>
    %87 = vector.shape_cast %86 : vector<8x8xf32> to vector<1x8x8xf32>
    %88 = vector.extract_strided_slice %36 {offsets = [0, 80], sizes = [8, 8], strides = [1, 1]} : vector<8x96xf32> to vector<8x8xf32>
    %89 = vector.shape_cast %88 : vector<8x8xf32> to vector<1x8x8xf32>
    "tpu.trace_start"() <{level = 10 : i32, message = "bqd,bkd->bqk"}> : () -> ()
    %cst_35 = arith.constant dense<0.000000e+00> : vector<1x8x8xf32>
    %90 = tpu.matmul %85, %87, %cst_35 {dimension_numbers = #tpu.dot_dimension_numbers<[2], [2], [1], [1], [0, 0, 0, 1, 1, 1], [0], [0]>} : vector<1x8x8xf32>, vector<1x8x8xf32>, vector<1x8x8xf32> -> vector<1x8x8xf32>
    "tpu.trace_stop"() : () -> ()
    %91 = arith.addf %90, %4 : vector<1x8x8xf32>
    %cst_36 = arith.constant dense<0xFF800000> : vector<1x8xf32>
    %92 = vector.multi_reduction <maximumf>, %91, %cst_36 [2] : vector<1x8x8xf32> to vector<1x8xf32>
    %93 = vector.shape_cast %92 : vector<1x8xf32> to vector<1x8x1xf32>
    %94 = vector.broadcast %93 : vector<1x8x1xf32> to vector<1x8x8xf32>
    %95 = arith.subf %91, %94 : vector<1x8x8xf32>
    %96 = math.exp %95 : vector<1x8x8xf32>
    %cst_37 = arith.constant dense<0.000000e+00> : vector<1x8xf32>
    %97 = vector.multi_reduction <add>, %96, %cst_37 [2] : vector<1x8x8xf32> to vector<1x8xf32>
    %98 = vector.shape_cast %97 : vector<1x8xf32> to vector<1x8x1xf32>
    %99 = tpu.reciprocal %98 {approx = true} : vector<1x8x1xf32> -> vector<1x8x1xf32>
    %100 = vector.broadcast %99 : vector<1x8x1xf32> to vector<1x8x8xf32>
    %101 = arith.mulf %96, %100 : vector<1x8x8xf32>
    "tpu.trace_start"() <{level = 10 : i32, message = "bqk,bkd->bqd"}> : () -> ()
    %cst_38 = arith.constant dense<0.000000e+00> : vector<1x8x8xf32>
    %102 = tpu.matmul %101, %89, %cst_38 {dimension_numbers = #tpu.dot_dimension_numbers<[2], [1], [1], [2], [0, 0, 0, 1, 1, 2], [0], [0]>} : vector<1x8x8xf32>, vector<1x8x8xf32>, vector<1x8x8xf32> -> vector<1x8x8xf32>
    "tpu.trace_stop"() : () -> ()
    %103 = vector.shape_cast %102 : vector<1x8x8xf32> to vector<8x8xf32>
    %104 = vector.extract_strided_slice %6 {offsets = [16, 0], sizes = [8, 32], strides = [1, 1]} : vector<32x32xf32> to vector<8x32xf32>
    %cst_39 = arith.constant dense<0.000000e+00> : vector<8x32xf32>
    %105 = tpu.matmul %103, %104, %cst_39 {dimension_numbers = #tpu.dot_dimension_numbers<[1], [0], [0], [1], [0, 0, 1, 1], [], []>} : vector<8x8xf32>, vector<8x32xf32>, vector<8x32xf32> -> vector<8x32xf32>
    %106 = arith.addf %83, %105 : vector<8x32xf32>
    %107 = vector.extract_strided_slice %36 {offsets = [0, 24], sizes = [8, 8], strides = [1, 1]} : vector<8x96xf32> to vector<8x8xf32>
    %108 = vector.shape_cast %107 : vector<8x8xf32> to vector<1x8x8xf32>
    %109 = vector.extract_strided_slice %36 {offsets = [0, 56], sizes = [8, 8], strides = [1, 1]} : vector<8x96xf32> to vector<8x8xf32>
    %110 = vector.shape_cast %109 : vector<8x8xf32> to vector<1x8x8xf32>
    %111 = vector.extract_strided_slice %36 {offsets = [0, 88], sizes = [8, 8], strides = [1, 1]} : vector<8x96xf32> to vector<8x8xf32>
    %112 = vector.shape_cast %111 : vector<8x8xf32> to vector<1x8x8xf32>
    "tpu.trace_start"() <{level = 10 : i32, message = "bqd,bkd->bqk"}> : () -> ()
    %cst_40 = arith.constant dense<0.000000e+00> : vector<1x8x8xf32>
    %113 = tpu.matmul %108, %110, %cst_40 {dimension_numbers = #tpu.dot_dimension_numbers<[2], [2], [1], [1], [0, 0, 0, 1, 1, 1], [0], [0]>} : vector<1x8x8xf32>, vector<1x8x8xf32>, vector<1x8x8xf32> -> vector<1x8x8xf32>
    "tpu.trace_stop"() : () -> ()
    %114 = arith.addf %113, %4 : vector<1x8x8xf32>
    %cst_41 = arith.constant dense<0xFF800000> : vector<1x8xf32>
    %115 = vector.multi_reduction <maximumf>, %114, %cst_41 [2] : vector<1x8x8xf32> to vector<1x8xf32>
    %116 = vector.shape_cast %115 : vector<1x8xf32> to vector<1x8x1xf32>
    %117 = vector.broadcast %116 : vector<1x8x1xf32> to vector<1x8x8xf32>
    %118 = arith.subf %114, %117 : vector<1x8x8xf32>
    %119 = math.exp %118 : vector<1x8x8xf32>
    %cst_42 = arith.constant dense<0.000000e+00> : vector<1x8xf32>
    %120 = vector.multi_reduction <add>, %119, %cst_42 [2] : vector<1x8x8xf32> to vector<1x8xf32>
    %121 = vector.shape_cast %120 : vector<1x8xf32> to vector<1x8x1xf32>
    %122 = tpu.reciprocal %121 {approx = true} : vector<1x8x1xf32> -> vector<1x8x1xf32>
    %123 = vector.broadcast %122 : vector<1x8x1xf32> to vector<1x8x8xf32>
    %124 = arith.mulf %119, %123 : vector<1x8x8xf32>
    "tpu.trace_start"() <{level = 10 : i32, message = "bqk,bkd->bqd"}> : () -> ()
    %cst_43 = arith.constant dense<0.000000e+00> : vector<1x8x8xf32>
    %125 = tpu.matmul %124, %112, %cst_43 {dimension_numbers = #tpu.dot_dimension_numbers<[2], [1], [1], [2], [0, 0, 0, 1, 1, 2], [0], [0]>} : vector<1x8x8xf32>, vector<1x8x8xf32>, vector<1x8x8xf32> -> vector<1x8x8xf32>
    "tpu.trace_stop"() : () -> ()
    %126 = vector.shape_cast %125 : vector<1x8x8xf32> to vector<8x8xf32>
    %127 = vector.extract_strided_slice %6 {offsets = [24, 0], sizes = [8, 32], strides = [1, 1]} : vector<32x32xf32> to vector<8x32xf32>
    %cst_44 = arith.constant dense<0.000000e+00> : vector<8x32xf32>
    %128 = tpu.matmul %126, %127, %cst_44 {dimension_numbers = #tpu.dot_dimension_numbers<[1], [0], [0], [1], [0, 0, 1, 1], [], []>} : vector<8x8xf32>, vector<8x32xf32>, vector<8x32xf32> -> vector<8x32xf32>
    %129 = arith.addf %106, %128 : vector<8x32xf32>
    %c0_45 = arith.constant 0 : index
    %c0_46 = arith.constant 0 : index
    %130 = vector.load %arg8[%c0_45, %c0_46] : memref<1x32xf32, #tpu.memory_space<vmem>>, vector<1x32xf32>
    %131 = vector.broadcast %130 : vector<1x32xf32> to vector<8x32xf32>
    %132 = arith.addf %129, %131 : vector<8x32xf32>
    %133 = arith.addf %132, %1 : vector<8x32xf32>
    %c0_47 = arith.constant 0 : index
    %c0_48 = arith.constant 0 : index
    %134 = vector.load %arg9[%c0_47, %c0_48] : memref<1x32xf32, #tpu.memory_space<vmem>>, vector<1x32xf32>
    %c0_49 = arith.constant 0 : index
    %c0_50 = arith.constant 0 : index
    %135 = vector.load %arg10[%c0_49, %c0_50] : memref<1x32xf32, #tpu.memory_space<vmem>>, vector<1x32xf32>
    %cst_51 = arith.constant dense<0.000000e+00> : vector<8xf32>
    %136 = vector.multi_reduction <add>, %133, %cst_51 [1] : vector<8x32xf32> to vector<8xf32>
    %137 = vector.shape_cast %136 : vector<8xf32> to vector<8x1xf32>
    %cst_52 = arith.constant 3.200000e+01 : f32
    %138 = vector.broadcast %cst_52 : f32 to vector<8x1xf32>
    %139 = arith.divf %137, %138 : vector<8x1xf32>
    %140 = vector.broadcast %139 : vector<8x1xf32> to vector<8x32xf32>
    %141 = arith.subf %133, %140 : vector<8x32xf32>
    %142 = arith.mulf %141, %141 : vector<8x32xf32>
    %cst_53 = arith.constant dense<0.000000e+00> : vector<8xf32>
    %143 = vector.multi_reduction <add>, %142, %cst_53 [1] : vector<8x32xf32> to vector<8xf32>
    %144 = vector.shape_cast %143 : vector<8xf32> to vector<8x1xf32>
    %cst_54 = arith.constant 3.200000e+01 : f32
    %145 = vector.broadcast %cst_54 : f32 to vector<8x1xf32>
    %146 = arith.divf %144, %145 : vector<8x1xf32>
    %147 = vector.broadcast %139 : vector<8x1xf32> to vector<8x32xf32>
    %148 = arith.subf %133, %147 : vector<8x32xf32>
    %cst_55 = arith.constant 9.99999997E-7 : f32
    %149 = vector.broadcast %cst_55 : f32 to vector<8x1xf32>
    %150 = arith.addf %146, %149 : vector<8x1xf32>
    %151 = math.rsqrt %150 : vector<8x1xf32>
    %152 = vector.broadcast %151 : vector<8x1xf32> to vector<8x32xf32>
    %153 = arith.mulf %148, %152 : vector<8x32xf32>
    %154 = vector.broadcast %134 : vector<1x32xf32> to vector<8x32xf32>
    %155 = arith.mulf %153, %154 : vector<8x32xf32>
    %156 = vector.broadcast %135 : vector<1x32xf32> to vector<8x32xf32>
    %157 = arith.addf %155, %156 : vector<8x32xf32>
    %cst_56 = arith.constant dense<0.000000e+00> : vector<8x64xf32>
    %158 = tpu.matmul %157, %7, %cst_56 {dimension_numbers = #tpu.dot_dimension_numbers<[1], [0], [0], [1], [0, 0, 1, 1], [], []>} : vector<8x32xf32>, vector<32x64xf32>, vector<8x64xf32> -> vector<8x64xf32>
    %c0_57 = arith.constant 0 : index
    %c0_58 = arith.constant 0 : index
    %159 = vector.load %arg12[%c0_57, %c0_58] : memref<1x64xf32, #tpu.memory_space<vmem>>, vector<1x64xf32>
    %160 = vector.broadcast %159 : vector<1x64xf32> to vector<8x64xf32>
    %161 = arith.addf %158, %160 : vector<8x64xf32>
    %cst_59 = arith.constant 0.000000e+00 : f32
    %162 = vector.broadcast %cst_59 : f32 to vector<8x64xf32>
    %163 = arith.maximumf %161, %162 : vector<8x64xf32>
    %cst_60 = arith.constant dense<0.000000e+00> : vector<8x32xf32>
    %164 = tpu.matmul %163, %8, %cst_60 {dimension_numbers = #tpu.dot_dimension_numbers<[1], [0], [0], [1], [0, 0, 1, 1], [], []>} : vector<8x64xf32>, vector<64x32xf32>, vector<8x32xf32> -> vector<8x32xf32>
    %c0_61 = arith.constant 0 : index
    %c0_62 = arith.constant 0 : index
    %165 = vector.load %arg14[%c0_61, %c0_62] : memref<1x32xf32, #tpu.memory_space<vmem>>, vector<1x32xf32>
    %166 = vector.broadcast %165 : vector<1x32xf32> to vector<8x32xf32>
    %167 = arith.addf %164, %166 : vector<8x32xf32>
    %168 = arith.addf %167, %133 : vector<8x32xf32>
    %c0_63 = arith.constant 0 : index
    %c0_64 = arith.constant 0 : index
    %169 = vector.load %arg15[%c0_63, %c0_64] : memref<1x32xf32, #tpu.memory_space<vmem>>, vector<1x32xf32>
    %c0_65 = arith.constant 0 : index
    %c0_66 = arith.constant 0 : index
    %170 = vector.load %arg16[%c0_65, %c0_66] : memref<1x32xf32, #tpu.memory_space<vmem>>, vector<1x32xf32>
    %cst_67 = arith.constant dense<0.000000e+00> : vector<8xf32>
    %171 = vector.multi_reduction <add>, %168, %cst_67 [1] : vector<8x32xf32> to vector<8xf32>
    %172 = vector.shape_cast %171 : vector<8xf32> to vector<8x1xf32>
    %cst_68 = arith.constant 3.200000e+01 : f32
    %173 = vector.broadcast %cst_68 : f32 to vector<8x1xf32>
    %174 = arith.divf %172, %173 : vector<8x1xf32>
    %175 = vector.broadcast %174 : vector<8x1xf32> to vector<8x32xf32>
    %176 = arith.subf %168, %175 : vector<8x32xf32>
    %177 = arith.mulf %176, %176 : vector<8x32xf32>
    %cst_69 = arith.constant dense<0.000000e+00> : vector<8xf32>
    %178 = vector.multi_reduction <add>, %177, %cst_69 [1] : vector<8x32xf32> to vector<8xf32>
    %179 = vector.shape_cast %178 : vector<8xf32> to vector<8x1xf32>
    %cst_70 = arith.constant 3.200000e+01 : f32
    %180 = vector.broadcast %cst_70 : f32 to vector<8x1xf32>
    %181 = arith.divf %179, %180 : vector<8x1xf32>
    %182 = vector.broadcast %174 : vector<8x1xf32> to vector<8x32xf32>
    %183 = arith.subf %168, %182 : vector<8x32xf32>
    %cst_71 = arith.constant 9.99999997E-7 : f32
    %184 = vector.broadcast %cst_71 : f32 to vector<8x1xf32>
    %185 = arith.addf %181, %184 : vector<8x1xf32>
    %186 = math.rsqrt %185 : vector<8x1xf32>
    %187 = vector.broadcast %186 : vector<8x1xf32> to vector<8x32xf32>
    %188 = arith.mulf %183, %187 : vector<8x32xf32>
    %189 = vector.broadcast %169 : vector<1x32xf32> to vector<8x32xf32>
    %190 = arith.mulf %188, %189 : vector<8x32xf32>
    %191 = vector.broadcast %170 : vector<1x32xf32> to vector<8x32xf32>
    %192 = arith.addf %190, %191 : vector<8x32xf32>
    %193 = vector.shape_cast %192 : vector<8x32xf32> to vector<1x8x32xf32>
    %c0_72 = arith.constant 0 : index
    %c0_73 = arith.constant 0 : index
    %c0_74 = arith.constant 0 : index
    %194 = vector.load %arg17[%c0_72, %c0_73, %c0_74] : memref<1x8x32xf32, #tpu.memory_space<vmem>>, vector<1x8x32xf32>
    tpu.vector_store %arg17[%c0_72, %c0_73, %c0_74], %193 {strides = array<i32>} : memref<1x8x32xf32, #tpu.memory_space<vmem>>, vector<1x8x32xf32>,
    return
  }
  func.func @transform_0(%arg0: i32) -> (i32, i32, i32) {
    %c0_i32 = arith.constant 0 : i32
    %c0_i32_0 = arith.constant 0 : i32
    %c0_i32_1 = arith.constant 0 : i32
    return %arg0, %c0_i32, %c0_i32_0 : i32, i32, i32
  }
  func.func @transform_1(%arg0: i32) -> (i32, i32, i32) {
    %c0_i32 = arith.constant 0 : i32
    %c0_i32_0 = arith.constant 0 : i32
    %c0_i32_1 = arith.constant 0 : i32
    return %arg0, %c0_i32, %c0_i32_0 : i32, i32, i32
  }
  func.func @transform_2(%arg0: i32) -> (i32, i32) {
    %c0_i32 = arith.constant 0 : i32
    %c0_i32_0 = arith.constant 0 : i32
    %c0_i32_1 = arith.constant 0 : i32
    return %c0_i32, %c0_i32_0 : i32, i32
  }
  func.func @transform_3(%arg0: i32) -> (i32, i32) {
    %c0_i32 = arith.constant 0 : i32
    %c0_i32_0 = arith.constant 0 : i32
    %c0_i32_1 = arith.constant 0 : i32
    return %c0_i32, %c0_i32_0 : i32, i32
  }
  func.func @transform_4(%arg0: i32) -> (i32, i32) {
    %c0_i32 = arith.constant 0 : i32
    %c0_i32_0 = arith.constant 0 : i32
    %c0_i32_1 = arith.constant 0 : i32
    return %c0_i32, %c0_i32_0 : i32, i32
  }
  func.func @transform_5(%arg0: i32) -> (i32, i32) {
    %c0_i32 = arith.constant 0 : i32
    %c0_i32_0 = arith.constant 0 : i32
    %c0_i32_1 = arith.constant 0 : i32
    return %c0_i32, %c0_i32_0 : i32, i32
  }
  func.func @transform_6(%arg0: i32) -> (i32, i32) {
    %c0_i32 = arith.constant 0 : i32
    %c0_i32_0 = arith.constant 0 : i32
    %c0_i32_1 = arith.constant 0 : i32
    return %c0_i32, %c0_i32_0 : i32, i32
  }
  func.func @transform_7(%arg0: i32) -> (i32, i32) {
    %c0_i32 = arith.constant 0 : i32
    %c0_i32_0 = arith.constant 0 : i32
    %c0_i32_1 = arith.constant 0 : i32
    return %c0_i32, %c0_i32_0 : i32, i32
  }
  func.func @transform_8(%arg0: i32) -> (i32, i32) {
    %c0_i32 = arith.constant 0 : i32
    %c0_i32_0 = arith.constant 0 : i32
    %c0_i32_1 = arith.constant 0 : i32
    return %c0_i32, %c0_i32_0 : i32, i32
  }
  func.func @transform_9(%arg0: i32) -> (i32, i32) {
    %c0_i32 = arith.constant 0 : i32
    %c0_i32_0 = arith.constant 0 : i32
    %c0_i32_1 = arith.constant 0 : i32
    return %c0_i32, %c0_i32_0 : i32, i32
  }
  func.func @transform_10(%arg0: i32) -> (i32, i32) {
    %c0_i32 = arith.constant 0 : i32
    %c0_i32_0 = arith.constant 0 : i32
    %c0_i32_1 = arith.constant 0 : i32
    return %c0_i32, %c0_i32_0 : i32, i32
  }
  func.func @transform_11(%arg0: i32) -> (i32, i32) {
    %c0_i32 = arith.constant 0 : i32
    %c0_i32_0 = arith.constant 0 : i32
    %c0_i32_1 = arith.constant 0 : i32
    return %c0_i32, %c0_i32_0 : i32, i32
  }
  func.func @transform_12(%arg0: i32) -> (i32, i32) {
    %c0_i32 = arith.constant 0 : i32
    %c0_i32_0 = arith.constant 0 : i32
    %c0_i32_1 = arith.constant 0 : i32
    return %c0_i32, %c0_i32_0 : i32, i32
  }
  func.func @transform_13(%arg0: i32) -> (i32, i32) {
    %c0_i32 = arith.constant 0 : i32
    %c0_i32_0 = arith.constant 0 : i32
    %c0_i32_1 = arith.constant 0 : i32
    return %c0_i32, %c0_i32_0 : i32, i32
  }
  func.func @transform_14(%arg0: i32) -> (i32, i32) {
    %c0_i32 = arith.constant 0 : i32
    %c0_i32_0 = arith.constant 0 : i32
    %c0_i32_1 = arith.constant 0 : i32
    return %c0_i32, %c0_i32_0 : i32, i32
  }
  func.func @transform_15(%arg0: i32) -> (i32, i32) {
    %c0_i32 = arith.constant 0 : i32
    %c0_i32_0 = arith.constant 0 : i32
    %c0_i32_1 = arith.constant 0 : i32
    return %c0_i32, %c0_i32_0 : i32, i32
  }
  func.func @transform_16(%arg0: i32) -> (i32, i32, i32) {
    %c0_i32 = arith.constant 0 : i32
    %c0_i32_0 = arith.constant 0 : i32
    %c0_i32_1 = arith.constant 0 : i32
    return %arg0, %c0_i32, %c0_i32_0 : i32, i32, i32
  }
}

</mosaic_0001>

<llo_original>
// kernel: tpu_custom_call.1
$region0: #{tpu_custom_call.1}
  #allocation0 [shape = 'u32[]', space=smem, size = 0x4, offset = 0x4, fixed_abs, tag = 'smem constant byte address 0x4 - core index']
  #allocation1 [shape = 'u32[144,128]{1,0:T(1,128)}', space=vmem, size = 0x12000, scoped, tag = 'internal scratch']
  %s0 = inlined_call_operand.hbm [shape: f32[2,8,32], index: 0, kind: input, shape index: {}]
  %s1 = inlined_call_operand.vmem [shape: f32[2,1,8], index: 1, kind: input, shape index: {}]
  %s2 = inlined_call_operand.vmem [shape: f32[1,32], index: 2, kind: input, shape index: {}]
  %s3 = inlined_call_operand.vmem [shape: f32[1,32], index: 3, kind: input, shape index: {}]
  %s4 = inlined_call_operand.vmem [shape: f32[32,96], index: 4, kind: input, shape index: {}]
  %s5 = inlined_call_operand.vmem [shape: f32[1,96], index: 5, kind: input, shape index: {}]
  %s6 = inlined_call_operand.vmem [shape: f32[32,32], index: 6, kind: input, shape index: {}]
  %s7 = inlined_call_operand.vmem [shape: f32[1,32], index: 7, kind: input, shape index: {}]
  %s8 = inlined_call_operand.vmem [shape: f32[1,32], index: 8, kind: input, shape index: {}]
  %s9 = inlined_call_operand.vmem [shape: f32[1,32], index: 9, kind: input, shape index: {}]
  %s10 = inlined_call_operand.vmem [shape: f32[32,64], index: 10, kind: input, shape index: {}]
  %s11 = inlined_call_operand.vmem [shape: f32[1,64], index: 11, kind: input, shape index: {}]
  %s12 = inlined_call_operand.vmem [shape: f32[64,32], index: 12, kind: input, shape index: {}]
  %s13 = inlined_call_operand.vmem [shape: f32[1,32], index: 13, kind: input, shape index: {}]
  %s14 = inlined_call_operand.vmem [shape: f32[1,32], index: 14, kind: input, shape index: {}]
  %s15 = inlined_call_operand.vmem [shape: f32[1,32], index: 15, kind: input, shape index: {}]
  %s16 = inlined_call_operand.hbm [shape: f32[2,8,32], index: 16, kind: output, shape index: {}]
  %s17 = sld [smem:[#allocation0]]
  $region101: #{tpu_custom_call.1} parent=0
    _
  %s19 = ssub.s32 1, %s17
  %s20 = scalar_select 0, %s19, %s17
  $region1: #{tpu_custom_call.1} parent=0
    #allocation2 [shape = 'u8[8192]{0}', space=vmem, size = 0x2000, scoped, tag = 'input window, operand 0']
    #allocation3 [shape = 's32[2]{0}', space=sflag, size = 0x8, scoped, tag = 'scoped memory for tpu_custom_call.1']
    #allocation4 [shape = 's32[2]{0}', space=sflag, size = 0x8, scoped, tag = 'scoped memory for tpu_custom_call.1']
    #allocation5 [shape = 'u8[8192]{0}', space=vmem, size = 0x2000, scoped, tag = 'output window, operand 0']
    %21 = vsyncpa [#allocation3], 0
    %s22 = scalar_lea.sflag [#allocation3], 1
    %23 = vsyncpa %s22, 0
    %24 = vsyncpa [#allocation4], 0
    %s25 = scalar_lea.sflag [#allocation4], 1
    %26 = vsyncpa %s25, 0
    loop: start=0, step=1, limit=4
    $region2: #{tpu_custom_call.1} parent=1 // loop_pre_header
      _
    $region3: #{tpu_custom_call.1} parent=1 // loop_header
      %s28 = sphi 0, %s32
      %p29 = scmp.ge.s32.totalorder %s28, 4
      %s38 = sphi 0, %s40
      %s41 = sphi 0, %s38
      %s42 = sphi 0, %s41
      %s58 = sphi 0, %s42
      %s64 = sphi 0, %s66
      %s67 = sphi 0, %s64
      %s68 = sphi 0, %s67
      %s84 = sphi 0, %s68
      %s88 = sphi 0, %s88
      %s90 = sphi 0, %s88
      %s91 = sphi 0, %s90
      %s105 = sphi 0, %s91
      %s109 = sphi 0, %s109
      %s111 = sphi 0, %s109
      %s112 = sphi 0, %s111
      %s126 = sphi 0, %s112
      %s130 = sphi 0, %s130
      %s132 = sphi 0, %s130
      %s133 = sphi 0, %s132
      %s147 = sphi 0, %s133
      %s151 = sphi 0, %s151
      %s153 = sphi 0, %s151
      %s154 = sphi 0, %s153
      %s168 = sphi 0, %s154
      %s172 = sphi 0, %s172
      %s174 = sphi 0, %s172
      %s175 = sphi 0, %s174
      %s189 = sphi 0, %s175
      %s193 = sphi 0, %s193
      %s195 = sphi 0, %s193
      %s196 = sphi 0, %s195
      %s210 = sphi 0, %s196
      %s214 = sphi 0, %s214
      %s216 = sphi 0, %s214
      %s217 = sphi 0, %s216
      %s231 = sphi 0, %s217
      %s235 = sphi 0, %s235
      %s237 = sphi 0, %s235
      %s238 = sphi 0, %s237
      %s252 = sphi 0, %s238
      %s256 = sphi 0, %s256
      %s258 = sphi 0, %s256
      %s259 = sphi 0, %s258
      %s273 = sphi 0, %s259
      %s277 = sphi 0, %s277
      %s279 = sphi 0, %s277
      %s280 = sphi 0, %s279
      %s294 = sphi 0, %s280
      %s298 = sphi 0, %s298
      %s300 = sphi 0, %s298
      %s301 = sphi 0, %s300
      %s315 = sphi 0, %s301
      %s319 = sphi 0, %s319
      %s321 = sphi 0, %s319
      %s322 = sphi 0, %s321
      %s336 = sphi 0, %s322
      %s340 = sphi 0, %s340
      %s342 = sphi 0, %s340
      %s343 = sphi 0, %s342
      %s357 = sphi 0, %s343
      %s361 = sphi 0, %s361
      %s363 = sphi 0, %s361
      %s364 = sphi 0, %s363
      %s378 = sphi 0, %s364
      %s384 = sphi 0, %s386
      %s387 = sphi 0, %s384
      %s388 = sphi 0, %s387
      %s404 = sphi 0, %s388
    $region4: #{tpu_custom_call.1} parent=1 // loop_header_branch
      %31 = sbr.rel (%p29) target = $region8
    $region5: #{tpu_custom_call.1} parent=1 // loop_body
      %s33 = ssub.s32 %s28, 1
      %s34 = ssub.s32 %s28, 2
      %s35 = sadd.s32 %s28, 1
      %s36 = ssub.s32 %s28, %s35
      %p37 = scmp.eq.s32.totalorder %s36, 0
      %s39 = sadd.s32 %s38, 1
      %s40 = scalar_select %p37, %s38, %s39
      %p43 = pneg %p37
      %p44 = scmp.eq.s32.totalorder %s28, 1
      %p45 = por %p43, %p44
      %p46 = scmp.ne.s32.totalorder %s38, %s41
      %p47 = scmp.eq.s32.totalorder %s28, 0
      %p48 = por %p46, %p47
      %p49 = scmp.ne.s32.totalorder %s38, %s41
      %p50 = scmp.eq.s32.totalorder %s33, 1
      %p51 = por %p49, %p50
      %p52 = scmp.ne.s32.totalorder %s41, %s42
      %p53 = scmp.eq.s32.totalorder %s33, 0
      %p54 = por %p52, %p53
      %p55 = scmp.ne.s32.totalorder %s41, %s42
      %p56 = scmp.eq.s32.totalorder %s34, 1
      %p57 = por %p55, %p56
      %p59 = scmp.ne.s32.totalorder %s42, %s58
      %p60 = scmp.eq.s32.totalorder %s34, 0
      %p61 = por %p59, %p60
      %s62 = ssub.s32 %s28, %s35
      %p63 = scmp.eq.s32.totalorder %s62, 0
      %s65 = sadd.s32 %s64, 1
      %s66 = scalar_select %p63, %s64, %s65
      %p69 = pneg %p63
      %p70 = scmp.eq.s32.totalorder %s28, 1
      %p71 = por %p69, %p70
      %p72 = scmp.ne.s32.totalorder %s64, %s67
      %p73 = scmp.eq.s32.totalorder %s28, 0
      %p74 = por %p72, %p73
      %p75 = scmp.ne.s32.totalorder %s64, %s67
      %p76 = scmp.eq.s32.totalorder %s33, 1
      %p77 = por %p75, %p76
      %p78 = scmp.ne.s32.totalorder %s67, %s68
      %p79 = scmp.eq.s32.totalorder %s33, 0
      %p80 = por %p78, %p79
      %p81 = scmp.ne.s32.totalorder %s67, %s68
      %p82 = scmp.eq.s32.totalorder %s34, 1
      %p83 = por %p81, %p82
      %p85 = scmp.ne.s32.totalorder %s68, %s84
      %p86 = scmp.eq.s32.totalorder %s34, 0
      %p87 = por %p85, %p86
      %s89 = sadd.s32 %s88, 1
      %p92 = scmp.eq.s32.totalorder %s28, 1
      %p93 = scmp.ne.s32.totalorder %s88, %s90
      %p94 = scmp.eq.s32.totalorder %s28, 0
      %p95 = por %p93, %p94
      %p96 = scmp.ne.s32.totalorder %s88, %s90
      %p97 = scmp.eq.s32.totalorder %s33, 1
      %p98 = por %p96, %p97
      %p99 = scmp.ne.s32.totalorder %s90, %s91
      %p100 = scmp.eq.s32.totalorder %s33, 0
      %p101 = por %p99, %p100
      %p102 = scmp.ne.s32.totalorder %s90, %s91
      %p103 = scmp.eq.s32.totalorder %s34, 1
      %p104 = por %p102, %p103
      %p106 = scmp.ne.s32.totalorder %s91, %s105
      %p107 = scmp.eq.s32.totalorder %s34, 0
      %p108 = por %p106, %p107
      %s110 = sadd.s32 %s109, 1
      %p113 = scmp.eq.s32.totalorder %s28, 1
      %p114 = scmp.ne.s32.totalorder %s109, %s111
      %p115 = scmp.eq.s32.totalorder %s28, 0
      %p116 = por %p114, %p115
      %p117 = scmp.ne.s32.totalorder %s109, %s111
      %p118 = scmp.eq.s32.totalorder %s33, 1
      %p119 = por %p117, %p118
      %p120 = scmp.ne.s32.totalorder %s111, %s112
      %p121 = scmp.eq.s32.totalorder %s33, 0
      %p122 = por %p120, %p121
      %p123 = scmp.ne.s32.totalorder %s111, %s112
      %p124 = scmp.eq.s32.totalorder %s34, 1
      %p125 = por %p123, %p124
      %p127 = scmp.ne.s32.totalorder %s112, %s126
      %p128 = scmp.eq.s32.totalorder %s34, 0
      %p129 = por %p127, %p128
      %s131 = sadd.s32 %s130, 1
      %p134 = scmp.eq.s32.totalorder %s28, 1
      %p135 = scmp.ne.s32.totalorder %s130, %s132
      %p136 = scmp.eq.s32.totalorder %s28, 0
      %p137 = por %p135, %p136
      %p138 = scmp.ne.s32.totalorder %s130, %s132
      %p139 = scmp.eq.s32.totalorder %s33, 1
      %p140 = por %p138, %p139
      %p141 = scmp.ne.s32.totalorder %s132, %s133
      %p142 = scmp.eq.s32.totalorder %s33, 0
      %p143 = por %p141, %p142
      %p144 = scmp.ne.s32.totalorder %s132, %s133
      %p145 = scmp.eq.s32.totalorder %s34, 1
      %p146 = por %p144, %p145
      %p148 = scmp.ne.s32.totalorder %s133, %s147
      %p149 = scmp.eq.s32.totalorder %s34, 0
      %p150 = por %p148, %p149
      %s152 = sadd.s32 %s151, 1
      %p155 = scmp.eq.s32.totalorder %s28, 1
      %p156 = scmp.ne.s32.totalorder %s151, %s153
      %p157 = scmp.eq.s32.totalorder %s28, 0
      %p158 = por %p156, %p157
      %p159 = scmp.ne.s32.totalorder %s151, %s153
      %p160 = scmp.eq.s32.totalorder %s33, 1
      %p161 = por %p159, %p160
      %p162 = scmp.ne.s32.totalorder %s153, %s154
      %p163 = scmp.eq.s32.totalorder %s33, 0
      %p164 = por %p162, %p163
      %p165 = scmp.ne.s32.totalorder %s153, %s154
      %p166 = scmp.eq.s32.totalorder %s34, 1
      %p167 = por %p165, %p166
      %p169 = scmp.ne.s32.totalorder %s154, %s168
      %p170 = scmp.eq.s32.totalorder %s34, 0
      %p171 = por %p169, %p170
      %s173 = sadd.s32 %s172, 1
      %p176 = scmp.eq.s32.totalorder %s28, 1
      %p177 = scmp.ne.s32.totalorder %s172, %s174
      %p178 = scmp.eq.s32.totalorder %s28, 0
      %p179 = por %p177, %p178
      %p180 = scmp.ne.s32.totalorder %s172, %s174
      %p181 = scmp.eq.s32.totalorder %s33, 1
      %p182 = por %p180, %p181
      %p183 = scmp.ne.s32.totalorder %s174, %s175
      %p184 = scmp.eq.s32.totalorder %s33, 0
      %p185 = por %p183, %p184
      %p186 = scmp.ne.s32.totalorder %s174, %s175
      %p187 = scmp.eq.s32.totalorder %s34, 1
      %p188 = por %p186, %p187
      %p190 = scmp.ne.s32.totalorder %s175, %s189
      %p191 = scmp.eq.s32.totalorder %s34, 0
      %p192 = por %p190, %p191
      %s194 = sadd.s32 %s193, 1
      %p197 = scmp.eq.s32.totalorder %s28, 1
      %p198 = scmp.ne.s32.totalorder %s193, %s195
      %p199 = scmp.eq.s32.totalorder %s28, 0
      %p200 = por %p198, %p199
      %p201 = scmp.ne.s32.totalorder %s193, %s195
      %p202 = scmp.eq.s32.totalorder %s33, 1
      %p203 = por %p201, %p202
      %p204 = scmp.ne.s32.totalorder %s195, %s196
      %p205 = scmp.eq.s32.totalorder %s33, 0
      %p206 = por %p204, %p205
      %p207 = scmp.ne.s32.totalorder %s195, %s196
      %p208 = scmp.eq.s32.totalorder %s34, 1
      %p209 = por %p207, %p208
      %p211 = scmp.ne.s32.totalorder %s196, %s210
      %p212 = scmp.eq.s32.totalorder %s34, 0
      %p213 = por %p211, %p212
      %s215 = sadd.s32 %s214, 1
      %p218 = scmp.eq.s32.totalorder %s28, 1
      %p219 = scmp.ne.s32.totalorder %s214, %s216
      %p220 = scmp.eq.s32.totalorder %s28, 0
      %p221 = por %p219, %p220
      %p222 = scmp.ne.s32.totalorder %s214, %s216
      %p223 = scmp.eq.s32.totalorder %s33, 1
      %p224 = por %p222, %p223
      %p225 = scmp.ne.s32.totalorder %s216, %s217
      %p226 = scmp.eq.s32.totalorder %s33, 0
      %p227 = por %p225, %p226
      %p228 = scmp.ne.s32.totalorder %s216, %s217
      %p229 = scmp.eq.s32.totalorder %s34, 1
      %p230 = por %p228, %p229
      %p232 = scmp.ne.s32.totalorder %s217, %s231
      %p233 = scmp.eq.s32.totalorder %s34, 0
      %p234 = por %p232, %p233
      %s236 = sadd.s32 %s235, 1
      %p239 = scmp.eq.s32.totalorder %s28, 1
      %p240 = scmp.ne.s32.totalorder %s235, %s237
      %p241 = scmp.eq.s32.totalorder %s28, 0
      %p242 = por %p240, %p241
      %p243 = scmp.ne.s32.totalorder %s235, %s237
      %p244 = scmp.eq.s32.totalorder %s33, 1
      %p245 = por %p243, %p244
      %p246 = scmp.ne.s32.totalorder %s237, %s238
      %p247 = scmp.eq.s32.totalorder %s33, 0
      %p248 = por %p246, %p247
      %p249 = scmp.ne.s32.totalorder %s237, %s238
      %p250 = scmp.eq.s32.totalorder %s34, 1
      %p251 = por %p249, %p250
      %p253 = scmp.ne.s32.totalorder %s238, %s252
      %p254 = scmp.eq.s32.totalorder %s34, 0
      %p255 = por %p253, %p254
      %s257 = sadd.s32 %s256, 1
      %p260 = scmp.eq.s32.totalorder %s28, 1
      %p261 = scmp.ne.s32.totalorder %s256, %s258
      %p262 = scmp.eq.s32.totalorder %s28, 0
      %p263 = por %p261, %p262
      %p264 = scmp.ne.s32.totalorder %s256, %s258
      %p265 = scmp.eq.s32.totalorder %s33, 1
      %p266 = por %p264, %p265
      %p267 = scmp.ne.s32.totalorder %s258, %s259
      %p268 = scmp.eq.s32.totalorder %s33, 0
      %p269 = por %p267, %p268
      %p270 = scmp.ne.s32.totalorder %s258, %s259
      %p271 = scmp.eq.s32.totalorder %s34, 1
      %p272 = por %p270, %p271
      %p274 = scmp.ne.s32.totalorder %s259, %s273
      %p275 = scmp.eq.s32.totalorder %s34, 0
      %p276 = por %p274, %p275
      %s278 = sadd.s32 %s277, 1
      %p281 = scmp.eq.s32.totalorder %s28, 1
      %p282 = scmp.ne.s32.totalorder %s277, %s279
      %p283 = scmp.eq.s32.totalorder %s28, 0
      %p284 = por %p282, %p283
      %p285 = scmp.ne.s32.totalorder %s277, %s279
      %p286 = scmp.eq.s32.totalorder %s33, 1
      %p287 = por %p285, %p286
      %p288 = scmp.ne.s32.totalorder %s279, %s280
      %p289 = scmp.eq.s32.totalorder %s33, 0
      %p290 = por %p288, %p289
      %p291 = scmp.ne.s32.totalorder %s279, %s280
      %p292 = scmp.eq.s32.totalorder %s34, 1
      %p293 = por %p291, %p292
      %p295 = scmp.ne.s32.totalorder %s280, %s294
      %p296 = scmp.eq.s32.totalorder %s34, 0
      %p297 = por %p295, %p296
      %s299 = sadd.s32 %s298, 1
      %p302 = scmp.eq.s32.totalorder %s28, 1
      %p303 = scmp.ne.s32.totalorder %s298, %s300
      %p304 = scmp.eq.s32.totalorder %s28, 0
      %p305 = por %p303, %p304
      %p306 = scmp.ne.s32.totalorder %s298, %s300
      %p307 = scmp.eq.s32.totalorder %s33, 1
      %p308 = por %p306, %p307
      %p309 = scmp.ne.s32.totalorder %s300, %s301
      %p310 = scmp.eq.s32.totalorder %s33, 0
      %p311 = por %p309, %p310
      %p312 = scmp.ne.s32.totalorder %s300, %s301
      %p313 = scmp.eq.s32.totalorder %s34, 1
      %p314 = por %p312, %p313
      %p316 = scmp.ne.s32.totalorder %s301, %s315
      %p317 = scmp.eq.s32.totalorder %s34, 0
      %p318 = por %p316, %p317
      %s320 = sadd.s32 %s319, 1
      %p323 = scmp.eq.s32.totalorder %s28, 1
      %p324 = scmp.ne.s32.totalorder %s319, %s321
      %p325 = scmp.eq.s32.totalorder %s28, 0
      %p326 = por %p324, %p325
      %p327 = scmp.ne.s32.totalorder %s319, %s321
      %p328 = scmp.eq.s32.totalorder %s33, 1
      %p329 = por %p327, %p328
      %p330 = scmp.ne.s32.totalorder %s321, %s322
      %p331 = scmp.eq.s32.totalorder %s33, 0
      %p332 = por %p330, %p331
      %p333 = scmp.ne.s32.totalorder %s321, %s322
      %p334 = scmp.eq.s32.totalorder %s34, 1
      %p335 = por %p333, %p334
      %p337 = scmp.ne.s32.totalorder %s322, %s336
      %p338 = scmp.eq.s32.totalorder %s34, 0
      %p339 = por %p337, %p338
      %s341 = sadd.s32 %s340, 1
      %p344 = scmp.eq.s32.totalorder %s28, 1
      %p345 = scmp.ne.s32.totalorder %s340, %s342
      %p346 = scmp.eq.s32.totalorder %s28, 0
      %p347 = por %p345, %p346
      %p348 = scmp.ne.s32.totalorder %s340, %s342
      %p349 = scmp.eq.s32.totalorder %s33, 1
      %p350 = por %p348, %p349
      %p351 = scmp.ne.s32.totalorder %s342, %s343
      %p352 = scmp.eq.s32.totalorder %s33, 0
      %p353 = por %p351, %p352
      %p354 = scmp.ne.s32.totalorder %s342, %s343
      %p355 = scmp.eq.s32.totalorder %s34, 1
      %p356 = por %p354, %p355
      %p358 = scmp.ne.s32.totalorder %s343, %s357
      %p359 = scmp.eq.s32.totalorder %s34, 0
      %p360 = por %p358, %p359
      %s362 = sadd.s32 %s361, 1
      %p365 = scmp.eq.s32.totalorder %s28, 1
      %p366 = scmp.ne.s32.totalorder %s361, %s363
      %p367 = scmp.eq.s32.totalorder %s28, 0
      %p368 = por %p366, %p367
      %p369 = scmp.ne.s32.totalorder %s361, %s363
      %p370 = scmp.eq.s32.totalorder %s33, 1
      %p371 = por %p369, %p370
      %p372 = scmp.ne.s32.totalorder %s363, %s364
      %p373 = scmp.eq.s32.totalorder %s33, 0
      %p374 = por %p372, %p373
      %p375 = scmp.ne.s32.totalorder %s363, %s364
      %p376 = scmp.eq.s32.totalorder %s34, 1
      %p377 = por %p375, %p376
      %p379 = scmp.ne.s32.totalorder %s364, %s378
      %p380 = scmp.eq.s32.totalorder %s34, 0
      %p381 = por %p379, %p380
      %s382 = ssub.s32 %s28, %s35
      %p383 = scmp.eq.s32.totalorder %s382, 0
      %s385 = sadd.s32 %s384, 1
      %s386 = scalar_select %p383, %s384, %s385
      %p389 = pneg %p383
      %p390 = scmp.eq.s32.totalorder %s28, 1
      %p391 = por %p389, %p390
      %p392 = scmp.ne.s32.totalorder %s384, %s387
      %p393 = scmp.eq.s32.totalorder %s28, 0
      %p394 = por %p392, %p393
      %p395 = scmp.ne.s32.totalorder %s384, %s387
      %p396 = scmp.eq.s32.totalorder %s33, 1
      %p397 = por %p395, %p396
      %p398 = scmp.ne.s32.totalorder %s387, %s388
      %p399 = scmp.eq.s32.totalorder %s33, 0
      %p400 = por %p398, %p399
      %p401 = scmp.ne.s32.totalorder %s387, %s388
      %p402 = scmp.eq.s32.totalorder %s34, 1
      %p403 = por %p401, %p402
      %p405 = scmp.ne.s32.totalorder %s388, %s404
      %p406 = scmp.eq.s32.totalorder %s34, 0
      %p407 = por %p405, %p406
      %p408 = scmp.le.s32.totalorder 1, %s28
      %p409 = scmp.lt.s32.totalorder %s28, 3
      %p410 = pnand %p408, %p409
      %p411 = pneg %p410
      // Predicated region
      $region9: #{tpu_custom_call.1} parent=5 // pred_check
        _
      $region10: #{tpu_custom_call.1} parent=5 // pred_check_branch
        %413 = sbr.rel (%p410) target = $region12
      $region11: #{tpu_custom_call.1} parent=5 // pred_region
        %s414 = ssub.s32 %s28, 1
        // Predicated region
        $region13: #{tpu_custom_call.1} parent=11 // pred_check
          %p415 = pneg %p101
        $region14: #{tpu_custom_call.1} parent=11 // pred_check_branch
          %417 = sbr.rel (%p415) target = $region16
        $region15: #{tpu_custom_call.1} parent=11 // pred_region
          _
        $region16: #{tpu_custom_call.1} parent=11 // pred_fallthru
          _
        // Predicated region
        $region17: #{tpu_custom_call.1} parent=11 // pred_check
          %p418 = pneg %p122
        $region18: #{tpu_custom_call.1} parent=11 // pred_check_branch
          %420 = sbr.rel (%p418) target = $region20
        $region19: #{tpu_custom_call.1} parent=11 // pred_region
          _
        $region20: #{tpu_custom_call.1} parent=11 // pred_fallthru
          _
        // Predicated region
        $region21: #{tpu_custom_call.1} parent=11 // pred_check
          %p421 = pneg %p143
        $region22: #{tpu_custom_call.1} parent=11 // pred_check_branch
          %423 = sbr.rel (%p421) target = $region24
        $region23: #{tpu_custom_call.1} parent=11 // pred_region
          _
        $region24: #{tpu_custom_call.1} parent=11 // pred_fallthru
          _
        // Predicated region
        $region25: #{tpu_custom_call.1} parent=11 // pred_check
          %p424 = pneg %p164
        $region26: #{tpu_custom_call.1} parent=11 // pred_check_branch
          %426 = sbr.rel (%p424) target = $region28
        $region27: #{tpu_custom_call.1} parent=11 // pred_region
          _
        $region28: #{tpu_custom_call.1} parent=11 // pred_fallthru
          _
        // Predicated region
        $region29: #{tpu_custom_call.1} parent=11 // pred_check
          %p427 = pneg %p185
        $region30: #{tpu_custom_call.1} parent=11 // pred_check_branch
          %429 = sbr.rel (%p427) target = $region32
        $region31: #{tpu_custom_call.1} parent=11 // pred_region
          _
        $region32: #{tpu_custom_call.1} parent=11 // pred_fallthru
          _
        // Predicated region
        $region33: #{tpu_custom_call.1} parent=11 // pred_check
          %p430 = pneg %p206
        $region34: #{tpu_custom_call.1} parent=11 // pred_check_branch
          %432 = sbr.rel (%p430) target = $region36
        $region35: #{tpu_custom_call.1} parent=11 // pred_region
          _
        $region36: #{tpu_custom_call.1} parent=11 // pred_fallthru
          _
        // Predicated region
        $region37: #{tpu_custom_call.1} parent=11 // pred_check
          %p433 = pneg %p227
        $region38: #{tpu_custom_call.1} parent=11 // pred_check_branch
          %435 = sbr.rel (%p433) target = $region40
        $region39: #{tpu_custom_call.1} parent=11 // pred_region
          _
        $region40: #{tpu_custom_call.1} parent=11 // pred_fallthru
          _
        // Predicated region
        $region41: #{tpu_custom_call.1} parent=11 // pred_check
          %p436 = pneg %p248
        $region42: #{tpu_custom_call.1} parent=11 // pred_check_branch
          %438 = sbr.rel (%p436) target = $region44
        $region43: #{tpu_custom_call.1} parent=11 // pred_region
          _
        $region44: #{tpu_custom_call.1} parent=11 // pred_fallthru
          _
        // Predicated region
        $region45: #{tpu_custom_call.1} parent=11 // pred_check
          %p439 = pneg %p269
        $region46: #{tpu_custom_call.1} parent=11 // pred_check_branch
          %441 = sbr.rel (%p439) target = $region48
        $region47: #{tpu_custom_call.1} parent=11 // pred_region
          _
        $region48: #{tpu_custom_call.1} parent=11 // pred_fallthru
          _
        // Predicated region
        $region49: #{tpu_custom_call.1} parent=11 // pred_check
          %p442 = pneg %p290
        $region50: #{tpu_custom_call.1} parent=11 // pred_check_branch
          %444 = sbr.rel (%p442) target = $region52
        $region51: #{tpu_custom_call.1} parent=11 // pred_region
          _
        $region52: #{tpu_custom_call.1} parent=11 // pred_fallthru
          _
        // Predicated region
        $region53: #{tpu_custom_call.1} parent=11 // pred_check
          %p445 = pneg %p311
        $region54: #{tpu_custom_call.1} parent=11 // pred_check_branch
          %447 = sbr.rel (%p445) target = $region56
        $region55: #{tpu_custom_call.1} parent=11 // pred_region
          _
        $region56: #{tpu_custom_call.1} parent=11 // pred_fallthru
          _
        // Predicated region
        $region57: #{tpu_custom_call.1} parent=11 // pred_check
          %p448 = pneg %p332
        $region58: #{tpu_custom_call.1} parent=11 // pred_check_branch
          %450 = sbr.rel (%p448) target = $region60
        $region59: #{tpu_custom_call.1} parent=11 // pred_region
          _
        $region60: #{tpu_custom_call.1} parent=11 // pred_fallthru
          _
        // Predicated region
        $region61: #{tpu_custom_call.1} parent=11 // pred_check
          %p451 = pneg %p353
        $region62: #{tpu_custom_call.1} parent=11 // pred_check_branch
          %453 = sbr.rel (%p451) target = $region64
        $region63: #{tpu_custom_call.1} parent=11 // pred_region
          _
        $region64: #{tpu_custom_call.1} parent=11 // pred_fallthru
          _
        // Predicated region
        $region65: #{tpu_custom_call.1} parent=11 // pred_check
          %p454 = pneg %p374
        $region66: #{tpu_custom_call.1} parent=11 // pred_check_branch
          %456 = sbr.rel (%p454) target = $region68
        $region67: #{tpu_custom_call.1} parent=11 // pred_region
          _
        $region68: #{tpu_custom_call.1} parent=11 // pred_fallthru
          _
      $region12: #{tpu_custom_call.1} parent=5 // pred_fallthru
        _
      %p457 = scmp.lt.s32.totalorder %s28, 2
      // Predicated region
      $region69: #{tpu_custom_call.1} parent=5 // pred_check
        %p458 = pneg %p457
      $region70: #{tpu_custom_call.1} parent=5 // pred_check_branch
        %460 = sbr.rel (%p458) target = $region72
      $region71: #{tpu_custom_call.1} parent=5 // pred_region
        // Predicated region
        $region73: #{tpu_custom_call.1} parent=71 // pred_check
          %p461 = pneg %p48
        $region74: #{tpu_custom_call.1} parent=71 // pred_check_branch
          %463 = sbr.rel (%p461) target = $region76
        $region75: #{tpu_custom_call.1} parent=71 // pred_region
          %s464 = sand.u32 %s38, 1
          %s465 = scalar_lea.sflag [#allocation3], %s464
          %s466 = sand.u32 %s38, 1
          %s467 = smul.addr %s466, 8
          %s468 = scalar_lea.vmem [#allocation2], %s467
          %s470 = ssub.s32 128, 128
          %471 = vsyncadd %s465, %s470
          %s472 = smul.addr %s28, 128
          %s473 = scalar_lea.hbm %s0, %s472
          %s475 = sshll.u32 %s468, 4
          %s476 = int_to_ptr.vmem [resolvable:$true] %s475
          %478 = dma.hbm_to_vmem [thread:$0]  %s473, 128, %s476, %s465
        $region76: #{tpu_custom_call.1} parent=71 // pred_fallthru
          _
        // Predicated region
        $region77: #{tpu_custom_call.1} parent=71 // pred_check
          %p479 = pneg %p74
        $region78: #{tpu_custom_call.1} parent=71 // pred_check_branch
          %481 = sbr.rel (%p479) target = $region80
        $region79: #{tpu_custom_call.1} parent=71 // pred_region
          %p482 = scmp.lt.s32.totalorder %s28, 1
          %s483 = scalar_select %p482, %s28, 1
          %s484 = scalar_lea.vmem %s1, %s483
        $region80: #{tpu_custom_call.1} parent=71 // pred_fallthru
          _
      $region72: #{tpu_custom_call.1} parent=5 // pred_fallthru
        _
      %p485 = scmp.le.s32.totalorder 1, %s28
      %p486 = scmp.lt.s32.totalorder %s28, 3
      %p487 = pnand %p485, %p486
      %p488 = pneg %p487
      // Predicated region
      $region81: #{tpu_custom_call.1} parent=5 // pred_check
        _
      $region82: #{tpu_custom_call.1} parent=5 // pred_check_branch
        %490 = sbr.rel (%p487) target = $region84
      $region83: #{tpu_custom_call.1} parent=5 // pred_region
        %s491 = ssub.s32 %s28, 1
        %s492 = sand.u32 %s41, 1
        %s493 = scalar_lea.sflag [#allocation3], %s492
        %s494 = sand.u32 %s41, 1
        %s495 = smul.addr %s494, 8
        %s496 = scalar_lea.vmem [#allocation2], %s495
        // Predicated region
        $region85: #{tpu_custom_call.1} parent=83 // pred_check
          %p497 = pneg %p54
        $region86: #{tpu_custom_call.1} parent=83 // pred_check_branch
          %499 = sbr.rel (%p497) target = $region88
        $region87: #{tpu_custom_call.1} parent=83 // pred_region
          %500 = dma.done %s493, 128
        $region88: #{tpu_custom_call.1} parent=83 // pred_fallthru
          _
        %s501 = sand.u32 %s41, 1
        %s502 = scalar_lea.sflag [#allocation3], %s501
        %s503 = sand.u32 %s41, 1
        %s504 = smul.addr %s503, 8
        %s505 = scalar_lea.vmem [#allocation2], %s504
        %p506 = pneg %p54
        %p507 = pneg %p51
        %p508 = scmp.lt.s32.totalorder %s33, 1
        %s509 = scalar_select %p508, %s33, 1
        %s510 = scalar_lea.vmem %s1, %s509
        %p511 = pneg %p80
        %p512 = pneg %p77
        %p513 = pneg %p101
        %p514 = pneg %p98
        %p515 = pneg %p122
        %p516 = pneg %p119
        %p517 = pneg %p143
        %p518 = pneg %p140
        %p519 = pneg %p164
        %p520 = pneg %p161
        %p521 = pneg %p185
        %p522 = pneg %p182
        %p523 = pneg %p206
        %p524 = pneg %p203
        %p525 = pneg %p227
        %p526 = pneg %p224
        %p527 = pneg %p248
        %p528 = pneg %p245
        %p529 = pneg %p269
        %p530 = pneg %p266
        %p531 = pneg %p290
        %p532 = pneg %p287
        %p533 = pneg %p311
        %p534 = pneg %p308
        %p535 = pneg %p332
        %p536 = pneg %p329
        %p537 = pneg %p353
        %p538 = pneg %p350
        %p539 = pneg %p374
        %p540 = pneg %p371
        %p541 = pneg %p400
        %p542 = pneg %p397
        %s543 = sand.u32 %s387, 1
        %s544 = scalar_lea.sflag [#allocation4], %s543
        %s545 = sand.u32 %s387, 1
        %s546 = smul.addr %s545, 8
        %s547 = scalar_lea.vmem [#allocation5], %s546
        %p548 = scmp.lt.s32.totalorder %s33, 1
        %s549 = scalar_select %p548, %s33, 1
        %s550 = scalar_lea.vmem %s1, %s549
        %v551 = vld [vmem:[%s496] sm:$0xff]
        %v552 = vld [vmem:[%s550] sm:$0x1]
        %v554 = vlaneseq
        %v555 = vshrl.u32 %v554, 7
        %v556 = vsub.s32 0, %v555
        %v557 = vrot.slane %v552, %v556
        %v559 = vld [vmem:[%s4] sm:$0xff]
        %v560 = vld [vmem:[%s4 + $0x8] sm:$0xff]
        %v561 = vld [vmem:[%s4 + $0x10] sm:$0xff]
        %v562 = vld [vmem:[%s4 + $0x18] sm:$0xff]
        %v563 = vld [vmem:[%s6] sm:$0xff]
        %v564 = vld [vmem:[%s6 + $0x8] sm:$0xff]
        %v565 = vld [vmem:[%s6 + $0x10] sm:$0xff]
        %v566 = vld [vmem:[%s6 + $0x18] sm:$0xff]
        %v567 = vld [vmem:[%s10] sm:$0xff]
        %v568 = vld [vmem:[%s10 + $0x8] sm:$0xff]
        %v569 = vld [vmem:[%s10 + $0x10] sm:$0xff]
        %v570 = vld [vmem:[%s10 + $0x18] sm:$0xff]
        %v571 = vld [vmem:[%s12] sm:$0xff]
        %v572 = vld [vmem:[%s12 + $0x8] sm:$0xff]
        %v573 = vld [vmem:[%s12 + $0x10] sm:$0xff]
        %v574 = vld [vmem:[%s12 + $0x18] sm:$0xff]
        %v575 = vld [vmem:[%s12 + $0x20] sm:$0xff]
        %v576 = vld [vmem:[%s12 + $0x28] sm:$0xff]
        %v577 = vld [vmem:[%s12 + $0x30] sm:$0xff]
        %v578 = vld [vmem:[%s12 + $0x38] sm:$0xff]
        %v579 = vld [vmem:[%s2] sm:$0x1]
        %v580 = vld [vmem:[%s3] sm:$0x1]
        %vm581 = vcmask 261120
        %v582 = vsel %vm581, %v551, 0.0
        %583 = vadd.xlane.f32.xlu0 %v582
        %v584 = vpop.xlane.xlu0 %583
        %v585 = vrcp.pop 32.0
        %v586 = vmul.f32 %v584, %v585
        %v587 = vsub.f32 %v551, %v586
        %v588 = vmul.f32 %v587, %v587
        %v589 = vsel %vm581, %v588, 0.0
        %590 = vadd.xlane.f32.xlu0 %v589
        %v591 = vpop.xlane.xlu0 %590
        %v592 = vmul.f32 %v591, %v585
        %v593 = vadd.f32 %v592, 1e-06
        %v594 = vrsqrt.pop %v593
        %v595 = vmul.f32 %v587, %v594
        %v597 = vlaneseq
        %v598 = vshrl.u32 %v597, 7
        %v599 = vsub.s32 0, %v598
        %v600 = vrot.slane %v579, %v599
        %v602 = vmul.f32 %v595, %v600
        %v604 = vlaneseq
        %v605 = vshrl.u32 %v604, 7
        %v606 = vsub.s32 0, %v605
        %v607 = vrot.slane %v580, %v606
        %v609 = vadd.f32 %v602, %v607
        %v610 = vld [vmem:[%s5] sm:$0x1]
        %v612 = vlaneseq
        %v613 = vshrl.u32 %v612, 7
        %v614 = vsub.s32 0, %v613
        %v615 = vrot.slane %v610, %v614
        %v618 = vsel %vm581, %v609, 0
        %620 = vmatprep.subr.mxu0 0.0
        %621 = vmatpush1.msra.mxu0 %v559
        %622 = vmatprep.subr.mxu0 0.0
        %623 = vmatpush1.msra.mxu0 %v560
        %624 = vmatprep.subr.mxu0 0.0
        %625 = vmatpush1.msra.mxu0 %v561
        %626 = vmatprep.subr.mxu0 0.0
        %627 = vmatpush1.msra.mxu0 %v562
        %628 = vmatprep.subr.mxu0 0.0
        %629 = vmatpush1.msra.mxu0 0.0
        %630 = vmatprep.subr.mxu0 0.0
        %631 = vmatpush1.msra.mxu0 0.0
        %632 = vmatprep.subr.mxu0 0.0
        %633 = vmatpush1.msra.mxu0 0.0
        %634 = vmatprep.subr.mxu0 0.0
        %635 = vmatpush1.msra.mxu0 0.0
        %636 = vmatprep.subr.mxu0 0.0
        %637 = vmatpush1.msra.mxu0 0.0
        %638 = vmatprep.subr.mxu0 0.0
        %639 = vmatpush1.msra.mxu0 0.0
        %640 = vmatprep.subr.mxu0 0.0
        %641 = vmatpush1.msra.mxu0 0.0
        %642 = vmatprep.subr.mxu0 0.0
        %643 = vmatpush1.msra.mxu0 0.0
        %644 = vmatprep.subr.mxu0 0.0
        %645 = vmatpush1.msra.mxu0 0.0
        %646 = vmatprep.subr.mxu0 0.0
        %647 = vmatpush1.msra.mxu0 0.0
        %648 = vmatprep.subr.mxu0 0.0
        %649 = vmatpush1.msra.mxu0 0.0
        %650 = vmatprep.subr.mxu0 0.0
        %651 = vmatpush1.msra.mxu0 0.0
        %652 = vmatprep.subr.mxu0 0.0
        %653 = vmatpush1.msra.mxu0 0.0
        %654 = vmatprep.subr.mxu0 0.0
        %655 = vmatpush1.msra.mxu0 0.0
        %656 = vmatprep.subr.mxu0 0.0
        %657 = vmatpush1.msra.mxu0 0.0
        %658 = vmatprep.subr.mxu0 0.0
        %659 = vmatpush1.msra.mxu0 0.0
        %660 = vmatprep.subr.mxu0 0.0
        %661 = vmatpush1.msra.mxu0 0.0
        %662 = vmatprep.subr.mxu0 0.0
        %663 = vmatpush1.msra.mxu0 0.0
        %664 = vmatprep.subr.mxu0 0.0
        %665 = vmatpush1.msra.mxu0 0.0
        %666 = vmatprep.subr.mxu0 0.0
        %667 = vmatpush1.msra.mxu0 0.0
        %668 = vmatprep.subr.mxu0 0.0
        %669 = vmatpush1.msra.mxu0 0.0
        %670 = vmatprep.subr.mxu0 0.0
        %671 = vmatpush1.msra.mxu0 0.0
        %672 = vmatprep.subr.mxu0 0.0
        %673 = vmatpush1.msra.mxu0 0.0
        %674 = vmatprep.subr.mxu0 0.0
        %675 = vmatpush1.msra.mxu0 0.0
        %676 = vmatprep.subr.mxu0 0.0
        %677 = vmatpush1.msra.mxu0 0.0
        %678 = vmatprep.subr.mxu0 0.0
        %679 = vmatpush1.msra.mxu0 0.0
        %680 = vmatprep.subr.mxu0 0.0
        %681 = vmatpush1.msra.mxu0 0.0
        %682 = vmatprep.subr.mxu0 0.0
        %683 = vmatpush1.msra.mxu0 0.0
        %684 = vmatprep.mubr.f32.mxu0 0.0
        %685 = vmatmul.mubr.f32.gmra.mrb[0].mxu0 %v618
        %v686 = vpop.f32.mrb[0].mxu0
        %v687 = vadd.f32 %v615, %v686
        %v688 = vpop.f32.mrb[0].mxu0
        %689 = vdwg.mxu0
        %691 = vrot.lane.b32.xlu0 %v687, 96
        %v692 = vpop.permute.xlu0 %691
        %vm693 = vcmask 64512
        %v694 = vsel %vm693, %v687, 0
        %v696 = vsel %vm693, %v692, 0
        %698 = vmatprep.subr.mxu0 0.0
        %699 = vmatpush1.xpose.msra.mxu0 %v696
        %700 = vmatprep.subr.mxu0 0.0
        %701 = vmatpush1.xpose.msra.mxu0 0.0
        %702 = vmatprep.subr.mxu0 0.0
        %703 = vmatpush1.xpose.msra.mxu0 0.0
        %704 = vmatprep.subr.mxu0 0.0
        %705 = vmatpush1.xpose.msra.mxu0 0.0
        %706 = vmatprep.subr.mxu0 0.0
        %707 = vmatpush1.xpose.msra.mxu0 0.0
        %708 = vmatprep.subr.mxu0 0.0
        %709 = vmatpush1.xpose.msra.mxu0 0.0
        %710 = vmatprep.subr.mxu0 0.0
        %711 = vmatpush1.xpose.msra.mxu0 0.0
        %712 = vmatprep.subr.mxu0 0.0
        %713 = vmatpush1.xpose.msra.mxu0 0.0
        %714 = vmatprep.subr.mxu0 0.0
        %715 = vmatpush1.xpose.msra.mxu0 0.0
        %716 = vmatprep.subr.mxu0 0.0
        %717 = vmatpush1.xpose.msra.mxu0 0.0
        %718 = vmatprep.subr.mxu0 0.0
        %719 = vmatpush1.xpose.msra.mxu0 0.0
        %720 = vmatprep.subr.mxu0 0.0
        %721 = vmatpush1.xpose.msra.mxu0 0.0
        %722 = vmatprep.subr.mxu0 0.0
        %723 = vmatpush1.xpose.msra.mxu0 0.0
        %724 = vmatprep.subr.mxu0 0.0
        %725 = vmatpush1.xpose.msra.mxu0 0.0
        %726 = vmatprep.subr.mxu0 0.0
        %727 = vmatpush1.xpose.msra.mxu0 0.0
        %728 = vmatprep.subr.mxu0 0.0
        %729 = vmatpush1.xpose.msra.mxu0 0.0
        %730 = vmatprep.subr.mxu0 0.0
        %731 = vmatpush1.xpose.msra.mxu0 0.0
        %732 = vmatprep.subr.mxu0 0.0
        %733 = vmatpush1.xpose.msra.mxu0 0.0
        %734 = vmatprep.subr.mxu0 0.0
        %735 = vmatpush1.xpose.msra.mxu0 0.0
        %736 = vmatprep.subr.mxu0 0.0
        %737 = vmatpush1.xpose.msra.mxu0 0.0
        %738 = vmatprep.subr.mxu0 0.0
        %739 = vmatpush1.xpose.msra.mxu0 0.0
        %740 = vmatprep.subr.mxu0 0.0
        %741 = vmatpush1.xpose.msra.mxu0 0.0
        %742 = vmatprep.subr.mxu0 0.0
        %743 = vmatpush1.xpose.msra.mxu0 0.0
        %744 = vmatprep.subr.mxu0 0.0
        %745 = vmatpush1.xpose.msra.mxu0 0.0
        %746 = vmatprep.subr.mxu0 0.0
        %747 = vmatpush1.xpose.msra.mxu0 0.0
        %748 = vmatprep.subr.mxu0 0.0
        %749 = vmatpush1.xpose.msra.mxu0 0.0
        %750 = vmatprep.subr.mxu0 0.0
        %751 = vmatpush1.xpose.msra.mxu0 0.0
        %752 = vmatprep.subr.mxu0 0.0
        %753 = vmatpush1.xpose.msra.mxu0 0.0
        %754 = vmatprep.subr.mxu0 0.0
        %755 = vmatpush1.xpose.msra.mxu0 0.0
        %756 = vmatprep.subr.mxu0 0.0
        %757 = vmatpush1.xpose.msra.mxu0 0.0
        %758 = vmatprep.subr.mxu0 0.0
        %759 = vmatpush1.xpose.msra.mxu0 0.0
        %760 = vmatprep.subr.mxu0 0.0
        %761 = vmatpush1.xpose.msra.mxu0 0.0
        %762 = vmatprep.mubr.f32.mxu0 0.0
        %763 = vmatmul.mubr.f32.gmra.mrb[0].mxu0 %v694
        %v764 = vpop.f32.mrb[0].mxu0
        %v765 = vadd.f32 %v557, %v764
        %v766 = vpop.f32.mrb[0].mxu0
        %767 = vdwg.mxu0
        %v768 = vsel %vm693, %v765, -inf
        %769 = vmax.xlane.f32.xlu0 %v768
        %v770 = vpop.xlane.xlu0 %769
        %v771 = vsub.f32 %v765, %v770
        %v772 = vmul.f32 %v771, 1.442695
        %v773 = vpow.pop %v772
        %v774 = vsel %vm693, %v773, 0.0
        %775 = vadd.xlane.f32.xlu0 %v774
        %v776 = vpop.xlane.xlu0 %775
        %v777 = vrcp.pop %v776
        %v778 = vmul.f32 %v773, %v777
        %779 = vrot.lane.b32.xlu0 %v687, 64
        %v780 = vpop.permute.xlu0 %779
        %v783 = vsel %vm693, %v778, 0
        %785 = vmatprep.subr.mxu0 0.0
        %786 = vmatpush1.msra.mxu0 %v780
        %787 = vmatprep.subr.mxu0 0.0
        %788 = vmatpush1.msra.mxu0 0.0
        %789 = vmatprep.subr.mxu0 0.0
        %790 = vmatpush1.msra.mxu0 0.0
        %791 = vmatprep.subr.mxu0 0.0
        %792 = vmatpush1.msra.mxu0 0.0
        %793 = vmatprep.subr.mxu0 0.0
        %794 = vmatpush1.msra.mxu0 0.0
        %795 = vmatprep.subr.mxu0 0.0
        %796 = vmatpush1.msra.mxu0 0.0
        %797 = vmatprep.subr.mxu0 0.0
        %798 = vmatpush1.msra.mxu0 0.0
        %799 = vmatprep.subr.mxu0 0.0
        %800 = vmatpush1.msra.mxu0 0.0
        %801 = vmatprep.subr.mxu0 0.0
        %802 = vmatpush1.msra.mxu0 0.0
        %803 = vmatprep.subr.mxu0 0.0
        %804 = vmatpush1.msra.mxu0 0.0
        %805 = vmatprep.subr.mxu0 0.0
        %806 = vmatpush1.msra.mxu0 0.0
        %807 = vmatprep.subr.mxu0 0.0
        %808 = vmatpush1.msra.mxu0 0.0
        %809 = vmatprep.subr.mxu0 0.0
        %810 = vmatpush1.msra.mxu0 0.0
        %811 = vmatprep.subr.mxu0 0.0
        %812 = vmatpush1.msra.mxu0 0.0
        %813 = vmatprep.subr.mxu0 0.0
        %814 = vmatpush1.msra.mxu0 0.0
        %815 = vmatprep.subr.mxu0 0.0
        %816 = vmatpush1.msra.mxu0 0.0
        %817 = vmatprep.subr.mxu0 0.0
        %818 = vmatpush1.msra.mxu0 0.0
        %819 = vmatprep.subr.mxu0 0.0
        %820 = vmatpush1.msra.mxu0 0.0
        %821 = vmatprep.subr.mxu0 0.0
        %822 = vmatpush1.msra.mxu0 0.0
        %823 = vmatprep.subr.mxu0 0.0
        %824 = vmatpush1.msra.mxu0 0.0
        %825 = vmatprep.subr.mxu0 0.0
        %826 = vmatpush1.msra.mxu0 0.0
        %827 = vmatprep.subr.mxu0 0.0
        %828 = vmatpush1.msra.mxu0 0.0
        %829 = vmatprep.subr.mxu0 0.0
        %830 = vmatpush1.msra.mxu0 0.0
        %831 = vmatprep.subr.mxu0 0.0
        %832 = vmatpush1.msra.mxu0 0.0
        %833 = vmatprep.subr.mxu0 0.0
        %834 = vmatpush1.msra.mxu0 0.0
        %835 = vmatprep.subr.mxu0 0.0
        %836 = vmatpush1.msra.mxu0 0.0
        %837 = vmatprep.subr.mxu0 0.0
        %838 = vmatpush1.msra.mxu0 0.0
        %839 = vmatprep.subr.mxu0 0.0
        %840 = vmatpush1.msra.mxu0 0.0
        %841 = vmatprep.subr.mxu0 0.0
        %842 = vmatpush1.msra.mxu0 0.0
        %843 = vmatprep.subr.mxu0 0.0
        %844 = vmatpush1.msra.mxu0 0.0
        %845 = vmatprep.subr.mxu0 0.0
        %846 = vmatpush1.msra.mxu0 0.0
        %847 = vmatprep.subr.mxu0 0.0
        %848 = vmatpush1.msra.mxu0 0.0
        %849 = vmatprep.mubr.f32.mxu0 0.0
        %850 = vmatmul.mubr.f32.gmra.mrb[0].mxu0 %v783
        %v851 = vpop.f32.mrb[0].mxu0
        %v852 = vadd.f32 0.0, %v851
        %v853 = vpop.f32.mrb[0].mxu0
        %854 = vdwg.mxu0
        %855 = vrot.lane.b32.xlu0 %v687, 120
        %v856 = vpop.permute.xlu0 %855
        %857 = vrot.lane.b32.xlu0 %v687, 88
        %v858 = vpop.permute.xlu0 %857
        %v859 = vsel %vm693, %v856, 0
        %v861 = vsel %vm693, %v858, 0
        %863 = vmatprep.subr.mxu0 0.0
        %864 = vmatpush1.xpose.msra.mxu0 %v861
        %865 = vmatprep.subr.mxu0 0.0
        %866 = vmatpush1.xpose.msra.mxu0 0.0
        %867 = vmatprep.subr.mxu0 0.0
        %868 = vmatpush1.xpose.msra.mxu0 0.0
        %869 = vmatprep.subr.mxu0 0.0
        %870 = vmatpush1.xpose.msra.mxu0 0.0
        %871 = vmatprep.subr.mxu0 0.0
        %872 = vmatpush1.xpose.msra.mxu0 0.0
        %873 = vmatprep.subr.mxu0 0.0
        %874 = vmatpush1.xpose.msra.mxu0 0.0
        %875 = vmatprep.subr.mxu0 0.0
        %876 = vmatpush1.xpose.msra.mxu0 0.0
        %877 = vmatprep.subr.mxu0 0.0
        %878 = vmatpush1.xpose.msra.mxu0 0.0
        %879 = vmatprep.subr.mxu0 0.0
        %880 = vmatpush1.xpose.msra.mxu0 0.0
        %881 = vmatprep.subr.mxu0 0.0
        %882 = vmatpush1.xpose.msra.mxu0 0.0
        %883 = vmatprep.subr.mxu0 0.0
        %884 = vmatpush1.xpose.msra.mxu0 0.0
        %885 = vmatprep.subr.mxu0 0.0
        %886 = vmatpush1.xpose.msra.mxu0 0.0
        %887 = vmatprep.subr.mxu0 0.0
        %888 = vmatpush1.xpose.msra.mxu0 0.0
        %889 = vmatprep.subr.mxu0 0.0
        %890 = vmatpush1.xpose.msra.mxu0 0.0
        %891 = vmatprep.subr.mxu0 0.0
        %892 = vmatpush1.xpose.msra.mxu0 0.0
        %893 = vmatprep.subr.mxu0 0.0
        %894 = vmatpush1.xpose.msra.mxu0 0.0
        %895 = vmatprep.subr.mxu0 0.0
        %896 = vmatpush1.xpose.msra.mxu0 0.0
        %897 = vmatprep.subr.mxu0 0.0
        %898 = vmatpush1.xpose.msra.mxu0 0.0
        %899 = vmatprep.subr.mxu0 0.0
        %900 = vmatpush1.xpose.msra.mxu0 0.0
        %901 = vmatprep.subr.mxu0 0.0
        %902 = vmatpush1.xpose.msra.mxu0 0.0
        %903 = vmatprep.subr.mxu0 0.0
        %904 = vmatpush1.xpose.msra.mxu0 0.0
        %905 = vmatprep.subr.mxu0 0.0
        %906 = vmatpush1.xpose.msra.mxu0 0.0
        %907 = vmatprep.subr.mxu0 0.0
        %908 = vmatpush1.xpose.msra.mxu0 0.0
        %909 = vmatprep.subr.mxu0 0.0
        %910 = vmatpush1.xpose.msra.mxu0 0.0
        %911 = vmatprep.subr.mxu0 0.0
        %912 = vmatpush1.xpose.msra.mxu0 0.0
        %913 = vmatprep.subr.mxu0 0.0
        %914 = vmatpush1.xpose.msra.mxu0 0.0
        %915 = vmatprep.subr.mxu0 0.0
        %916 = vmatpush1.xpose.msra.mxu0 0.0
        %917 = vmatprep.subr.mxu0 0.0
        %918 = vmatpush1.xpose.msra.mxu0 0.0
        %919 = vmatprep.subr.mxu0 0.0
        %920 = vmatpush1.xpose.msra.mxu0 0.0
        %921 = vmatprep.subr.mxu0 0.0
        %922 = vmatpush1.xpose.msra.mxu0 0.0
        %923 = vmatprep.subr.mxu0 0.0
        %924 = vmatpush1.xpose.msra.mxu0 0.0
        %925 = vmatprep.subr.mxu0 0.0
        %926 = vmatpush1.xpose.msra.mxu0 0.0
        %927 = vmatprep.mubr.f32.mxu0 0.0
        %928 = vmatmul.mubr.f32.gmra.mrb[0].mxu0 %v859
        %v929 = vpop.f32.mrb[0].mxu0
        %v930 = vadd.f32 %v557, %v929
        %v931 = vpop.f32.mrb[0].mxu0
        %932 = vdwg.mxu0
        %v933 = vsel %vm693, %v930, -inf
        %934 = vmax.xlane.f32.xlu0 %v933
        %v935 = vpop.xlane.xlu0 %934
        %v936 = vsub.f32 %v930, %v935
        %v937 = vmul.f32 %v936, 1.442695
        %v938 = vpow.pop %v937
        %v939 = vsel %vm693, %v938, 0.0
        %940 = vadd.xlane.f32.xlu0 %v939
        %v941 = vpop.xlane.xlu0 %940
        %v942 = vrcp.pop %v941
        %v943 = vmul.f32 %v938, %v942
        %944 = vrot.lane.b32.xlu0 %v687, 56
        %v945 = vpop.permute.xlu0 %944
        %v948 = vsel %vm693, %v943, 0
        %950 = vmatprep.subr.mxu0 0.0
        %951 = vmatpush1.msra.mxu0 %v945
        %952 = vmatprep.subr.mxu0 0.0
        %953 = vmatpush1.msra.mxu0 0.0
        %954 = vmatprep.subr.mxu0 0.0
        %955 = vmatpush1.msra.mxu0 0.0
        %956 = vmatprep.subr.mxu0 0.0
        %957 = vmatpush1.msra.mxu0 0.0
        %958 = vmatprep.subr.mxu0 0.0
        %959 = vmatpush1.msra.mxu0 0.0
        %960 = vmatprep.subr.mxu0 0.0
        %961 = vmatpush1.msra.mxu0 0.0
        %962 = vmatprep.subr.mxu0 0.0
        %963 = vmatpush1.msra.mxu0 0.0
        %964 = vmatprep.subr.mxu0 0.0
        %965 = vmatpush1.msra.mxu0 0.0
        %966 = vmatprep.subr.mxu0 0.0
        %967 = vmatpush1.msra.mxu0 0.0
        %968 = vmatprep.subr.mxu0 0.0
        %969 = vmatpush1.msra.mxu0 0.0
        %970 = vmatprep.subr.mxu0 0.0
        %971 = vmatpush1.msra.mxu0 0.0
        %972 = vmatprep.subr.mxu0 0.0
        %973 = vmatpush1.msra.mxu0 0.0
        %974 = vmatprep.subr.mxu0 0.0
        %975 = vmatpush1.msra.mxu0 0.0
        %976 = vmatprep.subr.mxu0 0.0
        %977 = vmatpush1.msra.mxu0 0.0
        %978 = vmatprep.subr.mxu0 0.0
        %979 = vmatpush1.msra.mxu0 0.0
        %980 = vmatprep.subr.mxu0 0.0
        %981 = vmatpush1.msra.mxu0 0.0
        %982 = vmatprep.subr.mxu0 0.0
        %983 = vmatpush1.msra.mxu0 0.0
        %984 = vmatprep.subr.mxu0 0.0
        %985 = vmatpush1.msra.mxu0 0.0
        %986 = vmatprep.subr.mxu0 0.0
        %987 = vmatpush1.msra.mxu0 0.0
        %988 = vmatprep.subr.mxu0 0.0
        %989 = vmatpush1.msra.mxu0 0.0
        %990 = vmatprep.subr.mxu0 0.0
        %991 = vmatpush1.msra.mxu0 0.0
        %992 = vmatprep.subr.mxu0 0.0
        %993 = vmatpush1.msra.mxu0 0.0
        %994 = vmatprep.subr.mxu0 0.0
        %995 = vmatpush1.msra.mxu0 0.0
        %996 = vmatprep.subr.mxu0 0.0
        %997 = vmatpush1.msra.mxu0 0.0
        %998 = vmatprep.subr.mxu0 0.0
        %999 = vmatpush1.msra.mxu0 0.0
        %1000 = vmatprep.subr.mxu0 0.0
        %1001 = vmatpush1.msra.mxu0 0.0
        %1002 = vmatprep.subr.mxu0 0.0
        %1003 = vmatpush1.msra.mxu0 0.0
        %1004 = vmatprep.subr.mxu0 0.0
        %1005 = vmatpush1.msra.mxu0 0.0
        %1006 = vmatprep.subr.mxu0 0.0
        %1007 = vmatpush1.msra.mxu0 0.0
        %1008 = vmatprep.subr.mxu0 0.0
        %1009 = vmatpush1.msra.mxu0 0.0
        %1010 = vmatprep.subr.mxu0 0.0
        %1011 = vmatpush1.msra.mxu0 0.0
        %1012 = vmatprep.subr.mxu0 0.0
        %1013 = vmatpush1.msra.mxu0 0.0
        %1014 = vmatprep.mubr.f32.mxu0 0.0
        %1015 = vmatmul.mubr.f32.gmra.mrb[0].mxu0 %v948
        %v1016 = vpop.f32.mrb[0].mxu0
        %v1017 = vadd.f32 0.0, %v1016
        %v1018 = vpop.f32.mrb[0].mxu0
        %1019 = vdwg.mxu0
        %v1021 = vsel %vm693, %v1017, 0
        %1023 = vmatprep.subr.mxu0 0.0
        %1024 = vmatpush1.msra.mxu0 %v564
        %1025 = vmatprep.subr.mxu0 0.0
        %1026 = vmatpush1.msra.mxu0 0.0
        %1027 = vmatprep.subr.mxu0 0.0
        %1028 = vmatpush1.msra.mxu0 0.0
        %1029 = vmatprep.subr.mxu0 0.0
        %1030 = vmatpush1.msra.mxu0 0.0
        %1031 = vmatprep.subr.mxu0 0.0
        %1032 = vmatpush1.msra.mxu0 0.0
        %1033 = vmatprep.subr.mxu0 0.0
        %1034 = vmatpush1.msra.mxu0 0.0
        %1035 = vmatprep.subr.mxu0 0.0
        %1036 = vmatpush1.msra.mxu0 0.0
        %1037 = vmatprep.subr.mxu0 0.0
        %1038 = vmatpush1.msra.mxu0 0.0
        %1039 = vmatprep.subr.mxu0 0.0
        %1040 = vmatpush1.msra.mxu0 0.0
        %1041 = vmatprep.subr.mxu0 0.0
        %1042 = vmatpush1.msra.mxu0 0.0
        %1043 = vmatprep.subr.mxu0 0.0
        %1044 = vmatpush1.msra.mxu0 0.0
        %1045 = vmatprep.subr.mxu0 0.0
        %1046 = vmatpush1.msra.mxu0 0.0
        %1047 = vmatprep.subr.mxu0 0.0
        %1048 = vmatpush1.msra.mxu0 0.0
        %1049 = vmatprep.subr.mxu0 0.0
        %1050 = vmatpush1.msra.mxu0 0.0
        %1051 = vmatprep.subr.mxu0 0.0
        %1052 = vmatpush1.msra.mxu0 0.0
        %1053 = vmatprep.subr.mxu0 0.0
        %1054 = vmatpush1.msra.mxu0 0.0
        %1055 = vmatprep.subr.mxu0 0.0
        %1056 = vmatpush1.msra.mxu0 0.0
        %1057 = vmatprep.subr.mxu0 0.0
        %1058 = vmatpush1.msra.mxu0 0.0
        %1059 = vmatprep.subr.mxu0 0.0
        %1060 = vmatpush1.msra.mxu0 0.0
        %1061 = vmatprep.subr.mxu0 0.0
        %1062 = vmatpush1.msra.mxu0 0.0
        %1063 = vmatprep.subr.mxu0 0.0
        %1064 = vmatpush1.msra.mxu0 0.0
        %1065 = vmatprep.subr.mxu0 0.0
        %1066 = vmatpush1.msra.mxu0 0.0
        %1067 = vmatprep.subr.mxu0 0.0
        %1068 = vmatpush1.msra.mxu0 0.0
        %1069 = vmatprep.subr.mxu0 0.0
        %1070 = vmatpush1.msra.mxu0 0.0
        %1071 = vmatprep.subr.mxu0 0.0
        %1072 = vmatpush1.msra.mxu0 0.0
        %1073 = vmatprep.subr.mxu0 0.0
        %1074 = vmatpush1.msra.mxu0 0.0
        %1075 = vmatprep.subr.mxu0 0.0
        %1076 = vmatpush1.msra.mxu0 0.0
        %1077 = vmatprep.subr.mxu0 0.0
        %1078 = vmatpush1.msra.mxu0 0.0
        %1079 = vmatprep.subr.mxu0 0.0
        %1080 = vmatpush1.msra.mxu0 0.0
        %1081 = vmatprep.subr.mxu0 0.0
        %1082 = vmatpush1.msra.mxu0 0.0
        %1083 = vmatprep.subr.mxu0 0.0
        %1084 = vmatpush1.msra.mxu0 0.0
        %1085 = vmatprep.subr.mxu0 0.0
        %1086 = vmatpush1.msra.mxu0 0.0
        %1087 = vmatprep.mubr.f32.mxu0 0.0
        %1088 = vmatmul.mubr.f32.gmra.mrb[0].mxu0 %v1021
        %v1089 = vpop.f32.mrb[0].mxu0
        %v1090 = vadd.f32 0.0, %v1089
        %v1091 = vpop.f32.mrb[0].mxu0
        %1092 = vdwg.mxu0
        %v1094 = vsel %vm693, %v852, 0
        %1096 = vmatprep.subr.mxu0 0.0
        %1097 = vmatpush1.msra.mxu0 %v563
        %1098 = vmatprep.subr.mxu0 0.0
        %1099 = vmatpush1.msra.mxu0 0.0
        %1100 = vmatprep.subr.mxu0 0.0
        %1101 = vmatpush1.msra.mxu0 0.0
        %1102 = vmatprep.subr.mxu0 0.0
        %1103 = vmatpush1.msra.mxu0 0.0
        %1104 = vmatprep.subr.mxu0 0.0
        %1105 = vmatpush1.msra.mxu0 0.0
        %1106 = vmatprep.subr.mxu0 0.0
        %1107 = vmatpush1.msra.mxu0 0.0
        %1108 = vmatprep.subr.mxu0 0.0
        %1109 = vmatpush1.msra.mxu0 0.0
        %1110 = vmatprep.subr.mxu0 0.0
        %1111 = vmatpush1.msra.mxu0 0.0
        %1112 = vmatprep.subr.mxu0 0.0
        %1113 = vmatpush1.msra.mxu0 0.0
        %1114 = vmatprep.subr.mxu0 0.0
        %1115 = vmatpush1.msra.mxu0 0.0
        %1116 = vmatprep.subr.mxu0 0.0
        %1117 = vmatpush1.msra.mxu0 0.0
        %1118 = vmatprep.subr.mxu0 0.0
        %1119 = vmatpush1.msra.mxu0 0.0
        %1120 = vmatprep.subr.mxu0 0.0
        %1121 = vmatpush1.msra.mxu0 0.0
        %1122 = vmatprep.subr.mxu0 0.0
        %1123 = vmatpush1.msra.mxu0 0.0
        %1124 = vmatprep.subr.mxu0 0.0
        %1125 = vmatpush1.msra.mxu0 0.0
        %1126 = vmatprep.subr.mxu0 0.0
        %1127 = vmatpush1.msra.mxu0 0.0
        %1128 = vmatprep.subr.mxu0 0.0
        %1129 = vmatpush1.msra.mxu0 0.0
        %1130 = vmatprep.subr.mxu0 0.0
        %1131 = vmatpush1.msra.mxu0 0.0
        %1132 = vmatprep.subr.mxu0 0.0
        %1133 = vmatpush1.msra.mxu0 0.0
        %1134 = vmatprep.subr.mxu0 0.0
        %1135 = vmatpush1.msra.mxu0 0.0
        %1136 = vmatprep.subr.mxu0 0.0
        %1137 = vmatpush1.msra.mxu0 0.0
        %1138 = vmatprep.subr.mxu0 0.0
        %1139 = vmatpush1.msra.mxu0 0.0
        %1140 = vmatprep.subr.mxu0 0.0
        %1141 = vmatpush1.msra.mxu0 0.0
        %1142 = vmatprep.subr.mxu0 0.0
        %1143 = vmatpush1.msra.mxu0 0.0
        %1144 = vmatprep.subr.mxu0 0.0
        %1145 = vmatpush1.msra.mxu0 0.0
        %1146 = vmatprep.subr.mxu0 0.0
        %1147 = vmatpush1.msra.mxu0 0.0
        %1148 = vmatprep.subr.mxu0 0.0
        %1149 = vmatpush1.msra.mxu0 0.0
        %1150 = vmatprep.subr.mxu0 0.0
        %1151 = vmatpush1.msra.mxu0 0.0
        %1152 = vmatprep.subr.mxu0 0.0
        %1153 = vmatpush1.msra.mxu0 0.0
        %1154 = vmatprep.subr.mxu0 0.0
        %1155 = vmatpush1.msra.mxu0 0.0
        %1156 = vmatprep.subr.mxu0 0.0
        %1157 = vmatpush1.msra.mxu0 0.0
        %1158 = vmatprep.subr.mxu0 0.0
        %1159 = vmatpush1.msra.mxu0 0.0
        %1160 = vmatprep.mubr.f32.mxu0 0.0
        %1161 = vmatmul.mubr.f32.gmra.mrb[0].mxu0 %v1094
        %v1162 = vpop.f32.mrb[0].mxu0
        %v1163 = vadd.f32 %v1090, %v1162
        %v1164 = vpop.f32.mrb[0].mxu0
        %1165 = vdwg.mxu0
        %1166 = vrot.lane.b32.xlu0 %v687, 112
        %v1167 = vpop.permute.xlu0 %1166
        %1168 = vrot.lane.b32.xlu0 %v687, 80
        %v1169 = vpop.permute.xlu0 %1168
        %v1170 = vsel %vm693, %v1167, 0
        %v1172 = vsel %vm693, %v1169, 0
        %1174 = vmatprep.subr.mxu0 0.0
        %1175 = vmatpush1.xpose.msra.mxu0 %v1172
        %1176 = vmatprep.subr.mxu0 0.0
        %1177 = vmatpush1.xpose.msra.mxu0 0.0
        %1178 = vmatprep.subr.mxu0 0.0
        %1179 = vmatpush1.xpose.msra.mxu0 0.0
        %1180 = vmatprep.subr.mxu0 0.0
        %1181 = vmatpush1.xpose.msra.mxu0 0.0
        %1182 = vmatprep.subr.mxu0 0.0
        %1183 = vmatpush1.xpose.msra.mxu0 0.0
        %1184 = vmatprep.subr.mxu0 0.0
        %1185 = vmatpush1.xpose.msra.mxu0 0.0
        %1186 = vmatprep.subr.mxu0 0.0
        %1187 = vmatpush1.xpose.msra.mxu0 0.0
        %1188 = vmatprep.subr.mxu0 0.0
        %1189 = vmatpush1.xpose.msra.mxu0 0.0
        %1190 = vmatprep.subr.mxu0 0.0
        %1191 = vmatpush1.xpose.msra.mxu0 0.0
        %1192 = vmatprep.subr.mxu0 0.0
        %1193 = vmatpush1.xpose.msra.mxu0 0.0
        %1194 = vmatprep.subr.mxu0 0.0
        %1195 = vmatpush1.xpose.msra.mxu0 0.0
        %1196 = vmatprep.subr.mxu0 0.0
        %1197 = vmatpush1.xpose.msra.mxu0 0.0
        %1198 = vmatprep.subr.mxu0 0.0
        %1199 = vmatpush1.xpose.msra.mxu0 0.0
        %1200 = vmatprep.subr.mxu0 0.0
        %1201 = vmatpush1.xpose.msra.mxu0 0.0
        %1202 = vmatprep.subr.mxu0 0.0
        %1203 = vmatpush1.xpose.msra.mxu0 0.0
        %1204 = vmatprep.subr.mxu0 0.0
        %1205 = vmatpush1.xpose.msra.mxu0 0.0
        %1206 = vmatprep.subr.mxu0 0.0
        %1207 = vmatpush1.xpose.msra.mxu0 0.0
        %1208 = vmatprep.subr.mxu0 0.0
        %1209 = vmatpush1.xpose.msra.mxu0 0.0
        %1210 = vmatprep.subr.mxu0 0.0
        %1211 = vmatpush1.xpose.msra.mxu0 0.0
        %1212 = vmatprep.subr.mxu0 0.0
        %1213 = vmatpush1.xpose.msra.mxu0 0.0
        %1214 = vmatprep.subr.mxu0 0.0
        %1215 = vmatpush1.xpose.msra.mxu0 0.0
        %1216 = vmatprep.subr.mxu0 0.0
        %1217 = vmatpush1.xpose.msra.mxu0 0.0
        %1218 = vmatprep.subr.mxu0 0.0
        %1219 = vmatpush1.xpose.msra.mxu0 0.0
        %1220 = vmatprep.subr.mxu0 0.0
        %1221 = vmatpush1.xpose.msra.mxu0 0.0
        %1222 = vmatprep.subr.mxu0 0.0
        %1223 = vmatpush1.xpose.msra.mxu0 0.0
        %1224 = vmatprep.subr.mxu0 0.0
        %1225 = vmatpush1.xpose.msra.mxu0 0.0
        %1226 = vmatprep.subr.mxu0 0.0
        %1227 = vmatpush1.xpose.msra.mxu0 0.0
        %1228 = vmatprep.subr.mxu0 0.0
        %1229 = vmatpush1.xpose.msra.mxu0 0.0
        %1230 = vmatprep.subr.mxu0 0.0
        %1231 = vmatpush1.xpose.msra.mxu0 0.0
        %1232 = vmatprep.subr.mxu0 0.0
        %1233 = vmatpush1.xpose.msra.mxu0 0.0
        %1234 = vmatprep.subr.mxu0 0.0
        %1235 = vmatpush1.xpose.msra.mxu0 0.0
        %1236 = vmatprep.subr.mxu0 0.0
        %1237 = vmatpush1.xpose.msra.mxu0 0.0
        %1238 = vmatprep.mubr.f32.mxu0 0.0
        %1239 = vmatmul.mubr.f32.gmra.mrb[0].mxu0 %v1170
        %v1240 = vpop.f32.mrb[0].mxu0
        %v1241 = vadd.f32 %v557, %v1240
        %v1242 = vpop.f32.mrb[0].mxu0
        %1243 = vdwg.mxu0
        %v1244 = vsel %vm693, %v1241, -inf
        %1245 = vmax.xlane.f32.xlu0 %v1244
        %v1246 = vpop.xlane.xlu0 %1245
        %v1247 = vsub.f32 %v1241, %v1246
        %v1248 = vmul.f32 %v1247, 1.442695
        %v1249 = vpow.pop %v1248
        %v1250 = vsel %vm693, %v1249, 0.0
        %1251 = vadd.xlane.f32.xlu0 %v1250
        %v1252 = vpop.xlane.xlu0 %1251
        %v1253 = vrcp.pop %v1252
        %v1254 = vmul.f32 %v1249, %v1253
        %1255 = vrot.lane.b32.xlu0 %v687, 48
        %v1256 = vpop.permute.xlu0 %1255
        %v1259 = vsel %vm693, %v1254, 0
        %1261 = vmatprep.subr.mxu0 0.0
        %1262 = vmatpush1.msra.mxu0 %v1256
        %1263 = vmatprep.subr.mxu0 0.0
        %1264 = vmatpush1.msra.mxu0 0.0
        %1265 = vmatprep.subr.mxu0 0.0
        %1266 = vmatpush1.msra.mxu0 0.0
        %1267 = vmatprep.subr.mxu0 0.0
        %1268 = vmatpush1.msra.mxu0 0.0
        %1269 = vmatprep.subr.mxu0 0.0
        %1270 = vmatpush1.msra.mxu0 0.0
        %1271 = vmatprep.subr.mxu0 0.0
        %1272 = vmatpush1.msra.mxu0 0.0
        %1273 = vmatprep.subr.mxu0 0.0
        %1274 = vmatpush1.msra.mxu0 0.0
        %1275 = vmatprep.subr.mxu0 0.0
        %1276 = vmatpush1.msra.mxu0 0.0
        %1277 = vmatprep.subr.mxu0 0.0
        %1278 = vmatpush1.msra.mxu0 0.0
        %1279 = vmatprep.subr.mxu0 0.0
        %1280 = vmatpush1.msra.mxu0 0.0
        %1281 = vmatprep.subr.mxu0 0.0
        %1282 = vmatpush1.msra.mxu0 0.0
        %1283 = vmatprep.subr.mxu0 0.0
        %1284 = vmatpush1.msra.mxu0 0.0
        %1285 = vmatprep.subr.mxu0 0.0
        %1286 = vmatpush1.msra.mxu0 0.0
        %1287 = vmatprep.subr.mxu0 0.0
        %1288 = vmatpush1.msra.mxu0 0.0
        %1289 = vmatprep.subr.mxu0 0.0
        %1290 = vmatpush1.msra.mxu0 0.0
        %1291 = vmatprep.subr.mxu0 0.0
        %1292 = vmatpush1.msra.mxu0 0.0
        %1293 = vmatprep.subr.mxu0 0.0
        %1294 = vmatpush1.msra.mxu0 0.0
        %1295 = vmatprep.subr.mxu0 0.0
        %1296 = vmatpush1.msra.mxu0 0.0
        %1297 = vmatprep.subr.mxu0 0.0
        %1298 = vmatpush1.msra.mxu0 0.0
        %1299 = vmatprep.subr.mxu0 0.0
        %1300 = vmatpush1.msra.mxu0 0.0
        %1301 = vmatprep.subr.mxu0 0.0
        %1302 = vmatpush1.msra.mxu0 0.0
        %1303 = vmatprep.subr.mxu0 0.0
        %1304 = vmatpush1.msra.mxu0 0.0
        %1305 = vmatprep.subr.mxu0 0.0
        %1306 = vmatpush1.msra.mxu0 0.0
        %1307 = vmatprep.subr.mxu0 0.0
        %1308 = vmatpush1.msra.mxu0 0.0
        %1309 = vmatprep.subr.mxu0 0.0
        %1310 = vmatpush1.msra.mxu0 0.0
        %1311 = vmatprep.subr.mxu0 0.0
        %1312 = vmatpush1.msra.mxu0 0.0
        %1313 = vmatprep.subr.mxu0 0.0
        %1314 = vmatpush1.msra.mxu0 0.0
        %1315 = vmatprep.subr.mxu0 0.0
        %1316 = vmatpush1.msra.mxu0 0.0
        %1317 = vmatprep.subr.mxu0 0.0
        %1318 = vmatpush1.msra.mxu0 0.0
        %1319 = vmatprep.subr.mxu0 0.0
        %1320 = vmatpush1.msra.mxu0 0.0
        %1321 = vmatprep.subr.mxu0 0.0
        %1322 = vmatpush1.msra.mxu0 0.0
        %1323 = vmatprep.subr.mxu0 0.0
        %1324 = vmatpush1.msra.mxu0 0.0
        %1325 = vmatprep.mubr.f32.mxu0 0.0
        %1326 = vmatmul.mubr.f32.gmra.mrb[0].mxu0 %v1259
        %v1327 = vpop.f32.mrb[0].mxu0
        %v1328 = vadd.f32 0.0, %v1327
        %v1329 = vpop.f32.mrb[0].mxu0
        %1330 = vdwg.mxu0
        %v1332 = vsel %vm693, %v1328, 0
        %1334 = vmatprep.subr.mxu0 0.0
        %1335 = vmatpush1.msra.mxu0 %v565
        %1336 = vmatprep.subr.mxu0 0.0
        %1337 = vmatpush1.msra.mxu0 0.0
        %1338 = vmatprep.subr.mxu0 0.0
        %1339 = vmatpush1.msra.mxu0 0.0
        %1340 = vmatprep.subr.mxu0 0.0
        %1341 = vmatpush1.msra.mxu0 0.0
        %1342 = vmatprep.subr.mxu0 0.0
        %1343 = vmatpush1.msra.mxu0 0.0
        %1344 = vmatprep.subr.mxu0 0.0
        %1345 = vmatpush1.msra.mxu0 0.0
        %1346 = vmatprep.subr.mxu0 0.0
        %1347 = vmatpush1.msra.mxu0 0.0
        %1348 = vmatprep.subr.mxu0 0.0
        %1349 = vmatpush1.msra.mxu0 0.0
        %1350 = vmatprep.subr.mxu0 0.0
        %1351 = vmatpush1.msra.mxu0 0.0
        %1352 = vmatprep.subr.mxu0 0.0
        %1353 = vmatpush1.msra.mxu0 0.0
        %1354 = vmatprep.subr.mxu0 0.0
        %1355 = vmatpush1.msra.mxu0 0.0
        %1356 = vmatprep.subr.mxu0 0.0
        %1357 = vmatpush1.msra.mxu0 0.0
        %1358 = vmatprep.subr.mxu0 0.0
        %1359 = vmatpush1.msra.mxu0 0.0
        %1360 = vmatprep.subr.mxu0 0.0
        %1361 = vmatpush1.msra.mxu0 0.0
        %1362 = vmatprep.subr.mxu0 0.0
        %1363 = vmatpush1.msra.mxu0 0.0
        %1364 = vmatprep.subr.mxu0 0.0
        %1365 = vmatpush1.msra.mxu0 0.0
        %1366 = vmatprep.subr.mxu0 0.0
        %1367 = vmatpush1.msra.mxu0 0.0
        %1368 = vmatprep.subr.mxu0 0.0
        %1369 = vmatpush1.msra.mxu0 0.0
        %1370 = vmatprep.subr.mxu0 0.0
        %1371 = vmatpush1.msra.mxu0 0.0
        %1372 = vmatprep.subr.mxu0 0.0
        %1373 = vmatpush1.msra.mxu0 0.0
        %1374 = vmatprep.subr.mxu0 0.0
        %1375 = vmatpush1.msra.mxu0 0.0
        %1376 = vmatprep.subr.mxu0 0.0
        %1377 = vmatpush1.msra.mxu0 0.0
        %1378 = vmatprep.subr.mxu0 0.0
        %1379 = vmatpush1.msra.mxu0 0.0
        %1380 = vmatprep.subr.mxu0 0.0
        %1381 = vmatpush1.msra.mxu0 0.0
        %1382 = vmatprep.subr.mxu0 0.0
        %1383 = vmatpush1.msra.mxu0 0.0
        %1384 = vmatprep.subr.mxu0 0.0
        %1385 = vmatpush1.msra.mxu0 0.0
        %1386 = vmatprep.subr.mxu0 0.0
        %1387 = vmatpush1.msra.mxu0 0.0
        %1388 = vmatprep.subr.mxu0 0.0
        %1389 = vmatpush1.msra.mxu0 0.0
        %1390 = vmatprep.subr.mxu0 0.0
        %1391 = vmatpush1.msra.mxu0 0.0
        %1392 = vmatprep.subr.mxu0 0.0
        %1393 = vmatpush1.msra.mxu0 0.0
        %1394 = vmatprep.subr.mxu0 0.0
        %1395 = vmatpush1.msra.mxu0 0.0
        %1396 = vmatprep.subr.mxu0 0.0
        %1397 = vmatpush1.msra.mxu0 0.0
        %1398 = vmatprep.mubr.f32.mxu0 0.0
        %1399 = vmatmul.mubr.f32.gmra.mrb[0].mxu0 %v1332
        %v1400 = vpop.f32.mrb[0].mxu0
        %v1401 = vadd.f32 0.0, %v1400
        %v1402 = vpop.f32.mrb[0].mxu0
        %1403 = vdwg.mxu0
        %v1404 = vadd.f32 %v1163, %v1401
        %1405 = vrot.lane.b32.xlu0 %v687, 104
        %v1406 = vpop.permute.xlu0 %1405
        %1407 = vrot.lane.b32.xlu0 %v687, 72
        %v1408 = vpop.permute.xlu0 %1407
        %v1409 = vsel %vm693, %v1406, 0
        %v1411 = vsel %vm693, %v1408, 0
        %1413 = vmatprep.subr.mxu0 0.0
        %1414 = vmatpush1.xpose.msra.mxu0 %v1411
        %1415 = vmatprep.subr.mxu0 0.0
        %1416 = vmatpush1.xpose.msra.mxu0 0.0
        %1417 = vmatprep.subr.mxu0 0.0
        %1418 = vmatpush1.xpose.msra.mxu0 0.0
        %1419 = vmatprep.subr.mxu0 0.0
        %1420 = vmatpush1.xpose.msra.mxu0 0.0
        %1421 = vmatprep.subr.mxu0 0.0
        %1422 = vmatpush1.xpose.msra.mxu0 0.0
        %1423 = vmatprep.subr.mxu0 0.0
        %1424 = vmatpush1.xpose.msra.mxu0 0.0
        %1425 = vmatprep.subr.mxu0 0.0
        %1426 = vmatpush1.xpose.msra.mxu0 0.0
        %1427 = vmatprep.subr.mxu0 0.0
        %1428 = vmatpush1.xpose.msra.mxu0 0.0
        %1429 = vmatprep.subr.mxu0 0.0
        %1430 = vmatpush1.xpose.msra.mxu0 0.0
        %1431 = vmatprep.subr.mxu0 0.0
        %1432 = vmatpush1.xpose.msra.mxu0 0.0
        %1433 = vmatprep.subr.mxu0 0.0
        %1434 = vmatpush1.xpose.msra.mxu0 0.0
        %1435 = vmatprep.subr.mxu0 0.0
        %1436 = vmatpush1.xpose.msra.mxu0 0.0
        %1437 = vmatprep.subr.mxu0 0.0
        %1438 = vmatpush1.xpose.msra.mxu0 0.0
        %1439 = vmatprep.subr.mxu0 0.0
        %1440 = vmatpush1.xpose.msra.mxu0 0.0
        %1441 = vmatprep.subr.mxu0 0.0
        %1442 = vmatpush1.xpose.msra.mxu0 0.0
        %1443 = vmatprep.subr.mxu0 0.0
        %1444 = vmatpush1.xpose.msra.mxu0 0.0
        %1445 = vmatprep.subr.mxu0 0.0
        %1446 = vmatpush1.xpose.msra.mxu0 0.0
        %1447 = vmatprep.subr.mxu0 0.0
        %1448 = vmatpush1.xpose.msra.mxu0 0.0
        %1449 = vmatprep.subr.mxu0 0.0
        %1450 = vmatpush1.xpose.msra.mxu0 0.0
        %1451 = vmatprep.subr.mxu0 0.0
        %1452 = vmatpush1.xpose.msra.mxu0 0.0
        %1453 = vmatprep.subr.mxu0 0.0
        %1454 = vmatpush1.xpose.msra.mxu0 0.0
        %1455 = vmatprep.subr.mxu0 0.0
        %1456 = vmatpush1.xpose.msra.mxu0 0.0
        %1457 = vmatprep.subr.mxu0 0.0
        %1458 = vmatpush1.xpose.msra.mxu0 0.0
        %1459 = vmatprep.subr.mxu0 0.0
        %1460 = vmatpush1.xpose.msra.mxu0 0.0
        %1461 = vmatprep.subr.mxu0 0.0
        %1462 = vmatpush1.xpose.msra.mxu0 0.0
        %1463 = vmatprep.subr.mxu0 0.0
        %1464 = vmatpush1.xpose.msra.mxu0 0.0
        %1465 = vmatprep.subr.mxu0 0.0
        %1466 = vmatpush1.xpose.msra.mxu0 0.0
        %1467 = vmatprep.subr.mxu0 0.0
        %1468 = vmatpush1.xpose.msra.mxu0 0.0
        %1469 = vmatprep.subr.mxu0 0.0
        %1470 = vmatpush1.xpose.msra.mxu0 0.0
        %1471 = vmatprep.subr.mxu0 0.0
        %1472 = vmatpush1.xpose.msra.mxu0 0.0
        %1473 = vmatprep.subr.mxu0 0.0
        %1474 = vmatpush1.xpose.msra.mxu0 0.0
        %1475 = vmatprep.subr.mxu0 0.0
        %1476 = vmatpush1.xpose.msra.mxu0 0.0
        %1477 = vmatprep.mubr.f32.mxu0 0.0
        %1478 = vmatmul.mubr.f32.gmra.mrb[0].mxu0 %v1409
        %v1479 = vpop.f32.mrb[0].mxu0
        %v1480 = vadd.f32 %v557, %v1479
        %v1481 = vpop.f32.mrb[0].mxu0
        %1482 = vdwg.mxu0
        %v1483 = vsel %vm693, %v1480, -inf
        %1484 = vmax.xlane.f32.xlu0 %v1483
        %v1485 = vpop.xlane.xlu0 %1484
        %v1486 = vsub.f32 %v1480, %v1485
        %v1487 = vmul.f32 %v1486, 1.442695
        %v1488 = vpow.pop %v1487
        %v1489 = vsel %vm693, %v1488, 0.0
        %1490 = vadd.xlane.f32.xlu0 %v1489
        %v1491 = vpop.xlane.xlu0 %1490
        %v1492 = vrcp.pop %v1491
        %v1493 = vmul.f32 %v1488, %v1492
        %1494 = vrot.lane.b32.xlu0 %v687, 40
        %v1495 = vpop.permute.xlu0 %1494
        %v1498 = vsel %vm693, %v1493, 0
        %1500 = vmatprep.subr.mxu0 0.0
        %1501 = vmatpush1.msra.mxu0 %v1495
        %1502 = vmatprep.subr.mxu0 0.0
        %1503 = vmatpush1.msra.mxu0 0.0
        %1504 = vmatprep.subr.mxu0 0.0
        %1505 = vmatpush1.msra.mxu0 0.0
        %1506 = vmatprep.subr.mxu0 0.0
        %1507 = vmatpush1.msra.mxu0 0.0
        %1508 = vmatprep.subr.mxu0 0.0
        %1509 = vmatpush1.msra.mxu0 0.0
        %1510 = vmatprep.subr.mxu0 0.0
        %1511 = vmatpush1.msra.mxu0 0.0
        %1512 = vmatprep.subr.mxu0 0.0
        %1513 = vmatpush1.msra.mxu0 0.0
        %1514 = vmatprep.subr.mxu0 0.0
        %1515 = vmatpush1.msra.mxu0 0.0
        %1516 = vmatprep.subr.mxu0 0.0
        %1517 = vmatpush1.msra.mxu0 0.0
        %1518 = vmatprep.subr.mxu0 0.0
        %1519 = vmatpush1.msra.mxu0 0.0
        %1520 = vmatprep.subr.mxu0 0.0
        %1521 = vmatpush1.msra.mxu0 0.0
        %1522 = vmatprep.subr.mxu0 0.0
        %1523 = vmatpush1.msra.mxu0 0.0
        %1524 = vmatprep.subr.mxu0 0.0
        %1525 = vmatpush1.msra.mxu0 0.0
        %1526 = vmatprep.subr.mxu0 0.0
        %1527 = vmatpush1.msra.mxu0 0.0
        %1528 = vmatprep.subr.mxu0 0.0
        %1529 = vmatpush1.msra.mxu0 0.0
        %1530 = vmatprep.subr.mxu0 0.0
        %1531 = vmatpush1.msra.mxu0 0.0
        %1532 = vmatprep.subr.mxu0 0.0
        %1533 = vmatpush1.msra.mxu0 0.0
        %1534 = vmatprep.subr.mxu0 0.0
        %1535 = vmatpush1.msra.mxu0 0.0
        %1536 = vmatprep.subr.mxu0 0.0
        %1537 = vmatpush1.msra.mxu0 0.0
        %1538 = vmatprep.subr.mxu0 0.0
        %1539 = vmatpush1.msra.mxu0 0.0
        %1540 = vmatprep.subr.mxu0 0.0
        %1541 = vmatpush1.msra.mxu0 0.0
        %1542 = vmatprep.subr.mxu0 0.0
        %1543 = vmatpush1.msra.mxu0 0.0
        %1544 = vmatprep.subr.mxu0 0.0
        %1545 = vmatpush1.msra.mxu0 0.0
        %1546 = vmatprep.subr.mxu0 0.0
        %1547 = vmatpush1.msra.mxu0 0.0
        %1548 = vmatprep.subr.mxu0 0.0
        %1549 = vmatpush1.msra.mxu0 0.0
        %1550 = vmatprep.subr.mxu0 0.0
        %1551 = vmatpush1.msra.mxu0 0.0
        %1552 = vmatprep.subr.mxu0 0.0
        %1553 = vmatpush1.msra.mxu0 0.0
        %1554 = vmatprep.subr.mxu0 0.0
        %1555 = vmatpush1.msra.mxu0 0.0
        %1556 = vmatprep.subr.mxu0 0.0
        %1557 = vmatpush1.msra.mxu0 0.0
        %1558 = vmatprep.subr.mxu0 0.0
        %1559 = vmatpush1.msra.mxu0 0.0
        %1560 = vmatprep.subr.mxu0 0.0
        %1561 = vmatpush1.msra.mxu0 0.0
        %1562 = vmatprep.subr.mxu0 0.0
        %1563 = vmatpush1.msra.mxu0 0.0
        %1564 = vmatprep.mubr.f32.mxu0 0.0
        %1565 = vmatmul.mubr.f32.gmra.mrb[0].mxu0 %v1498
        %v1566 = vpop.f32.mrb[0].mxu0
        %v1567 = vadd.f32 0.0, %v1566
        %v1568 = vpop.f32.mrb[0].mxu0
        %1569 = vdwg.mxu0
        %v1571 = vsel %vm693, %v1567, 0
        %1573 = vmatprep.subr.mxu0 0.0
        %1574 = vmatpush1.msra.mxu0 %v566
        %1575 = vmatprep.subr.mxu0 0.0
        %1576 = vmatpush1.msra.mxu0 0.0
        %1577 = vmatprep.subr.mxu0 0.0
        %1578 = vmatpush1.msra.mxu0 0.0
        %1579 = vmatprep.subr.mxu0 0.0
        %1580 = vmatpush1.msra.mxu0 0.0
        %1581 = vmatprep.subr.mxu0 0.0
        %1582 = vmatpush1.msra.mxu0 0.0
        %1583 = vmatprep.subr.mxu0 0.0
        %1584 = vmatpush1.msra.mxu0 0.0
        %1585 = vmatprep.subr.mxu0 0.0
        %1586 = vmatpush1.msra.mxu0 0.0
        %1587 = vmatprep.subr.mxu0 0.0
        %1588 = vmatpush1.msra.mxu0 0.0
        %1589 = vmatprep.subr.mxu0 0.0
        %1590 = vmatpush1.msra.mxu0 0.0
        %1591 = vmatprep.subr.mxu0 0.0
        %1592 = vmatpush1.msra.mxu0 0.0
        %1593 = vmatprep.subr.mxu0 0.0
        %1594 = vmatpush1.msra.mxu0 0.0
        %1595 = vmatprep.subr.mxu0 0.0
        %1596 = vmatpush1.msra.mxu0 0.0
        %1597 = vmatprep.subr.mxu0 0.0
        %1598 = vmatpush1.msra.mxu0 0.0
        %1599 = vmatprep.subr.mxu0 0.0
        %1600 = vmatpush1.msra.mxu0 0.0
        %1601 = vmatprep.subr.mxu0 0.0
        %1602 = vmatpush1.msra.mxu0 0.0
        %1603 = vmatprep.subr.mxu0 0.0
        %1604 = vmatpush1.msra.mxu0 0.0
        %1605 = vmatprep.subr.mxu0 0.0
        %1606 = vmatpush1.msra.mxu0 0.0
        %1607 = vmatprep.subr.mxu0 0.0
        %1608 = vmatpush1.msra.mxu0 0.0
        %1609 = vmatprep.subr.mxu0 0.0
        %1610 = vmatpush1.msra.mxu0 0.0
        %1611 = vmatprep.subr.mxu0 0.0
        %1612 = vmatpush1.msra.mxu0 0.0
        %1613 = vmatprep.subr.mxu0 0.0
        %1614 = vmatpush1.msra.mxu0 0.0
        %1615 = vmatprep.subr.mxu0 0.0
        %1616 = vmatpush1.msra.mxu0 0.0
        %1617 = vmatprep.subr.mxu0 0.0
        %1618 = vmatpush1.msra.mxu0 0.0
        %1619 = vmatprep.subr.mxu0 0.0
        %1620 = vmatpush1.msra.mxu0 0.0
        %1621 = vmatprep.subr.mxu0 0.0
        %1622 = vmatpush1.msra.mxu0 0.0
        %1623 = vmatprep.subr.mxu0 0.0
        %1624 = vmatpush1.msra.mxu0 0.0
        %1625 = vmatprep.subr.mxu0 0.0
        %1626 = vmatpush1.msra.mxu0 0.0
        %1627 = vmatprep.subr.mxu0 0.0
        %1628 = vmatpush1.msra.mxu0 0.0
        %1629 = vmatprep.subr.mxu0 0.0
        %1630 = vmatpush1.msra.mxu0 0.0
        %1631 = vmatprep.subr.mxu0 0.0
        %1632 = vmatpush1.msra.mxu0 0.0
        %1633 = vmatprep.subr.mxu0 0.0
        %1634 = vmatpush1.msra.mxu0 0.0
        %1635 = vmatprep.subr.mxu0 0.0
        %1636 = vmatpush1.msra.mxu0 0.0
        %1637 = vmatprep.mubr.f32.mxu0 0.0
        %1638 = vmatmul.mubr.f32.gmra.mrb[0].mxu0 %v1571
        %v1639 = vpop.f32.mrb[0].mxu0
        %v1640 = vadd.f32 0.0, %v1639
        %v1641 = vpop.f32.mrb[0].mxu0
        %1642 = vdwg.mxu0
        %v1643 = vadd.f32 %v1404, %v1640
        %v1644 = vld [vmem:[%s7] sm:$0x1]
        %v1646 = vlaneseq
        %v1647 = vshrl.u32 %v1646, 7
        %v1648 = vsub.s32 0, %v1647
        %v1649 = vrot.slane %v1644, %v1648
        %v1651 = vadd.f32 %v1643, %v1649
        %v1652 = vadd.f32 %v1651, %v551
        %v1653 = vld [vmem:[%s8] sm:$0x1]
        %v1654 = vld [vmem:[%s9] sm:$0x1]
        %v1655 = vsel %vm581, %v1652, 0.0
        %1656 = vadd.xlane.f32.xlu0 %v1655
        %v1657 = vpop.xlane.xlu0 %1656
        %v1658 = vmul.f32 %v1657, %v585
        %v1659 = vsub.f32 %v1652, %v1658
        %v1660 = vmul.f32 %v1659, %v1659
        %v1661 = vsel %vm581, %v1660, 0.0
        %1662 = vadd.xlane.f32.xlu0 %v1661
        %v1663 = vpop.xlane.xlu0 %1662
        %v1664 = vmul.f32 %v1663, %v585
        %v1665 = vadd.f32 %v1664, 1e-06
        %v1666 = vrsqrt.pop %v1665
        %v1667 = vmul.f32 %v1659, %v1666
        %v1669 = vlaneseq
        %v1670 = vshrl.u32 %v1669, 7
        %v1671 = vsub.s32 0, %v1670
        %v1672 = vrot.slane %v1653, %v1671
        %v1674 = vmul.f32 %v1667, %v1672
        %v1676 = vlaneseq
        %v1677 = vshrl.u32 %v1676, 7
        %v1678 = vsub.s32 0, %v1677
        %v1679 = vrot.slane %v1654, %v1678
        %v1681 = vadd.f32 %v1674, %v1679
        %v1682 = vld [vmem:[%s11] sm:$0x1]
        %v1684 = vlaneseq
        %v1685 = vshrl.u32 %v1684, 7
        %v1686 = vsub.s32 0, %v1685
        %v1687 = vrot.slane %v1682, %v1686
        %v1690 = vsel %vm581, %v1681, 0
        %1692 = vmatprep.subr.mxu0 0.0
        %1693 = vmatpush1.msra.mxu0 %v567
        %1694 = vmatprep.subr.mxu0 0.0
        %1695 = vmatpush1.msra.mxu0 %v568
        %1696 = vmatprep.subr.mxu0 0.0
        %1697 = vmatpush1.msra.mxu0 %v569
        %1698 = vmatprep.subr.mxu0 0.0
        %1699 = vmatpush1.msra.mxu0 %v570
        %1700 = vmatprep.subr.mxu0 0.0
        %1701 = vmatpush1.msra.mxu0 0.0
        %1702 = vmatprep.subr.mxu0 0.0
        %1703 = vmatpush1.msra.mxu0 0.0
        %1704 = vmatprep.subr.mxu0 0.0
        %1705 = vmatpush1.msra.mxu0 0.0
        %1706 = vmatprep.subr.mxu0 0.0
        %1707 = vmatpush1.msra.mxu0 0.0
        %1708 = vmatprep.subr.mxu0 0.0
        %1709 = vmatpush1.msra.mxu0 0.0
        %1710 = vmatprep.subr.mxu0 0.0
        %1711 = vmatpush1.msra.mxu0 0.0
        %1712 = vmatprep.subr.mxu0 0.0
        %1713 = vmatpush1.msra.mxu0 0.0
        %1714 = vmatprep.subr.mxu0 0.0
        %1715 = vmatpush1.msra.mxu0 0.0
        %1716 = vmatprep.subr.mxu0 0.0
        %1717 = vmatpush1.msra.mxu0 0.0
        %1718 = vmatprep.subr.mxu0 0.0
        %1719 = vmatpush1.msra.mxu0 0.0
        %1720 = vmatprep.subr.mxu0 0.0
        %1721 = vmatpush1.msra.mxu0 0.0
        %1722 = vmatprep.subr.mxu0 0.0
        %1723 = vmatpush1.msra.mxu0 0.0
        %1724 = vmatprep.subr.mxu0 0.0
        %1725 = vmatpush1.msra.mxu0 0.0
        %1726 = vmatprep.subr.mxu0 0.0
        %1727 = vmatpush1.msra.mxu0 0.0
        %1728 = vmatprep.subr.mxu0 0.0
        %1729 = vmatpush1.msra.mxu0 0.0
        %1730 = vmatprep.subr.mxu0 0.0
        %1731 = vmatpush1.msra.mxu0 0.0
        %1732 = vmatprep.subr.mxu0 0.0
        %1733 = vmatpush1.msra.mxu0 0.0
        %1734 = vmatprep.subr.mxu0 0.0
        %1735 = vmatpush1.msra.mxu0 0.0
        %1736 = vmatprep.subr.mxu0 0.0
        %1737 = vmatpush1.msra.mxu0 0.0
        %1738 = vmatprep.subr.mxu0 0.0
        %1739 = vmatpush1.msra.mxu0 0.0
        %1740 = vmatprep.subr.mxu0 0.0
        %1741 = vmatpush1.msra.mxu0 0.0
        %1742 = vmatprep.subr.mxu0 0.0
        %1743 = vmatpush1.msra.mxu0 0.0
        %1744 = vmatprep.subr.mxu0 0.0
        %1745 = vmatpush1.msra.mxu0 0.0
        %1746 = vmatprep.subr.mxu0 0.0
        %1747 = vmatpush1.msra.mxu0 0.0
        %1748 = vmatprep.subr.mxu0 0.0
        %1749 = vmatpush1.msra.mxu0 0.0
        %1750 = vmatprep.subr.mxu0 0.0
        %1751 = vmatpush1.msra.mxu0 0.0
        %1752 = vmatprep.subr.mxu0 0.0
        %1753 = vmatpush1.msra.mxu0 0.0
        %1754 = vmatprep.subr.mxu0 0.0
        %1755 = vmatpush1.msra.mxu0 0.0
        %1756 = vmatprep.mubr.f32.mxu0 0.0
        %1757 = vmatmul.mubr.f32.gmra.mrb[0].mxu0 %v1690
        %v1758 = vpop.f32.mrb[0].mxu0
        %v1759 = vadd.f32 %v1687, %v1758
        %v1760 = vpop.f32.mrb[0].mxu0
        %1761 = vdwg.mxu0
        %v1762 = vmax.f32 %v1759, 0.0
        %v1763 = vld [vmem:[%s13] sm:$0x1]
        %v1765 = vlaneseq
        %v1766 = vshrl.u32 %v1765, 7
        %v1767 = vsub.s32 0, %v1766
        %v1768 = vrot.slane %v1763, %v1767
        %vm1770 = vcmask 523264
        %v1772 = vsel %vm1770, %v1762, 0
        %1774 = vmatprep.subr.mxu0 0.0
        %1775 = vmatpush1.msra.mxu0 %v571
        %1776 = vmatprep.subr.mxu0 0.0
        %1777 = vmatpush1.msra.mxu0 %v572
        %1778 = vmatprep.subr.mxu0 0.0
        %1779 = vmatpush1.msra.mxu0 %v573
        %1780 = vmatprep.subr.mxu0 0.0
        %1781 = vmatpush1.msra.mxu0 %v574
        %1782 = vmatprep.subr.mxu0 0.0
        %1783 = vmatpush1.msra.mxu0 %v575
        %1784 = vmatprep.subr.mxu0 0.0
        %1785 = vmatpush1.msra.mxu0 %v576
        %1786 = vmatprep.subr.mxu0 0.0
        %1787 = vmatpush1.msra.mxu0 %v577
        %1788 = vmatprep.subr.mxu0 0.0
        %1789 = vmatpush1.msra.mxu0 %v578
        %1790 = vmatprep.subr.mxu0 0.0
        %1791 = vmatpush1.msra.mxu0 0.0
        %1792 = vmatprep.subr.mxu0 0.0
        %1793 = vmatpush1.msra.mxu0 0.0
        %1794 = vmatprep.subr.mxu0 0.0
        %1795 = vmatpush1.msra.mxu0 0.0
        %1796 = vmatprep.subr.mxu0 0.0
        %1797 = vmatpush1.msra.mxu0 0.0
        %1798 = vmatprep.subr.mxu0 0.0
        %1799 = vmatpush1.msra.mxu0 0.0
        %1800 = vmatprep.subr.mxu0 0.0
        %1801 = vmatpush1.msra.mxu0 0.0
        %1802 = vmatprep.subr.mxu0 0.0
        %1803 = vmatpush1.msra.mxu0 0.0
        %1804 = vmatprep.subr.mxu0 0.0
        %1805 = vmatpush1.msra.mxu0 0.0
        %1806 = vmatprep.subr.mxu0 0.0
        %1807 = vmatpush1.msra.mxu0 0.0
        %1808 = vmatprep.subr.mxu0 0.0
        %1809 = vmatpush1.msra.mxu0 0.0
        %1810 = vmatprep.subr.mxu0 0.0
        %1811 = vmatpush1.msra.mxu0 0.0
        %1812 = vmatprep.subr.mxu0 0.0
        %1813 = vmatpush1.msra.mxu0 0.0
        %1814 = vmatprep.subr.mxu0 0.0
        %1815 = vmatpush1.msra.mxu0 0.0
        %1816 = vmatprep.subr.mxu0 0.0
        %1817 = vmatpush1.msra.mxu0 0.0
        %1818 = vmatprep.subr.mxu0 0.0
        %1819 = vmatpush1.msra.mxu0 0.0
        %1820 = vmatprep.subr.mxu0 0.0
        %1821 = vmatpush1.msra.mxu0 0.0
        %1822 = vmatprep.subr.mxu0 0.0
        %1823 = vmatpush1.msra.mxu0 0.0
        %1824 = vmatprep.subr.mxu0 0.0
        %1825 = vmatpush1.msra.mxu0 0.0
        %1826 = vmatprep.subr.mxu0 0.0
        %1827 = vmatpush1.msra.mxu0 0.0
        %1828 = vmatprep.subr.mxu0 0.0
        %1829 = vmatpush1.msra.mxu0 0.0
        %1830 = vmatprep.subr.mxu0 0.0
        %1831 = vmatpush1.msra.mxu0 0.0
        %1832 = vmatprep.subr.mxu0 0.0
        %1833 = vmatpush1.msra.mxu0 0.0
        %1834 = vmatprep.subr.mxu0 0.0
        %1835 = vmatpush1.msra.mxu0 0.0
        %1836 = vmatprep.subr.mxu0 0.0
        %1837 = vmatpush1.msra.mxu0 0.0
        %1838 = vmatprep.mubr.f32.mxu0 0.0
        %1839 = vmatmul.mubr.f32.gmra.mrb[0].mxu0 %v1772
        %v1840 = vpop.f32.mrb[0].mxu0
        %v1841 = vadd.f32 %v1768, %v1840
        %v1842 = vpop.f32.mrb[0].mxu0
        %1843 = vdwg.mxu0
        %v1844 = vadd.f32 %v1841, %v1652
        %v1845 = vld [vmem:[%s14] sm:$0x1]
        %v1846 = vld [vmem:[%s15] sm:$0x1]
        %v1847 = vsel %vm581, %v1844, 0.0
        %1848 = vadd.xlane.f32.xlu0 %v1847
        %v1849 = vpop.xlane.xlu0 %1848
        %v1850 = vmul.f32 %v1849, %v585
        %v1851 = vsub.f32 %v1844, %v1850
        %v1852 = vmul.f32 %v1851, %v1851
        %v1853 = vsel %vm581, %v1852, 0.0
        %1854 = vadd.xlane.f32.xlu0 %v1853
        %v1855 = vpop.xlane.xlu0 %1854
        %v1856 = vmul.f32 %v1855, %v585
        %v1857 = vadd.f32 %v1856, 1e-06
        %v1858 = vrsqrt.pop %v1857
        %v1859 = vmul.f32 %v1851, %v1858
        %v1861 = vlaneseq
        %v1862 = vshrl.u32 %v1861, 7
        %v1863 = vsub.s32 0, %v1862
        %v1864 = vrot.slane %v1845, %v1863
        %v1866 = vmul.f32 %v1859, %v1864
        %v1868 = vlaneseq
        %v1869 = vshrl.u32 %v1868, 7
        %v1870 = vsub.s32 0, %v1869
        %v1871 = vrot.slane %v1846, %v1870
        %v1873 = vadd.f32 %v1866, %v1871
        %1874 = vst.msk [vmem:[%s547] sm:$0xff] %vm581, %v1873
        %s1875 = sand.u32 %s387, 1
        %s1876 = scalar_lea.sflag [#allocation4], %s1875
        %s1877 = sand.u32 %s387, 1
        %s1878 = smul.addr %s1877, 8
        %s1879 = scalar_lea.vmem [#allocation5], %s1878
        // Predicated region
        $region89: #{tpu_custom_call.1} parent=83 // pred_check
          %p1880 = pneg %p397
        $region90: #{tpu_custom_call.1} parent=83 // pred_check_branch
          %1882 = sbr.rel (%p1880) target = $region92
        $region91: #{tpu_custom_call.1} parent=83 // pred_region
          %s1884 = ssub.s32 128, 128
          %1885 = vsyncadd %s1876, %s1884
          %s1886 = smul.addr %s33, 128
          %s1887 = scalar_lea.hbm %s16, %s1886
          %s1889 = sshll.u32 %s1879, 4
          %s1890 = int_to_ptr.vmem [resolvable:$true] %s1889
          %1892 = dma.vmem_to_hbm [thread:$0]  %s1890, 128, %s1887, %s1876
        $region92: #{tpu_custom_call.1} parent=83 // pred_fallthru
          _
      $region84: #{tpu_custom_call.1} parent=5 // pred_fallthru
        _
      %p1893 = scmp.le.s32.totalorder 2, %s28
      // Predicated region
      $region93: #{tpu_custom_call.1} parent=5 // pred_check
        %p1894 = pneg %p1893
      $region94: #{tpu_custom_call.1} parent=5 // pred_check_branch
        %1896 = sbr.rel (%p1894) target = $region96
      $region95: #{tpu_custom_call.1} parent=5 // pred_region
        %s1897 = ssub.s32 %s28, 2
        // Predicated region
        $region97: #{tpu_custom_call.1} parent=95 // pred_check
          %p1898 = pneg %p403
        $region98: #{tpu_custom_call.1} parent=95 // pred_check_branch
          %1900 = sbr.rel (%p1898) target = $region100
        $region99: #{tpu_custom_call.1} parent=95 // pred_region
          %s1901 = sand.u32 %s388, 1
          %s1902 = scalar_lea.sflag [#allocation4], %s1901
          %s1903 = sand.u32 %s388, 1
          %s1904 = smul.addr %s1903, 8
          %s1905 = scalar_lea.vmem [#allocation5], %s1904
          %1906 = dma.done %s1902, 128
        $region100: #{tpu_custom_call.1} parent=95 // pred_fallthru
          _
      $region96: #{tpu_custom_call.1} parent=5 // pred_fallthru
        _
    $region6: #{tpu_custom_call.1} parent=1 // loop_footer
      %s32 = sadd.s32 1, %s28
    $region7: #{tpu_custom_call.1} parent=1 // loop_footer_branch
      %27 = sbr.rel target = $region3
    $region8: #{tpu_custom_call.1} parent=1 // loop_exit
      _
    %1907 = vsyncpa [#allocation3], 1
    %s1908 = scalar_lea.sflag [#allocation3], 1
    %1909 = vsyncpa %s1908, 1
    %1910 = vsyncpa [#allocation4], 1
    %s1911 = scalar_lea.sflag [#allocation4], 1
    %1912 = vsyncpa %s1911, 1

</llo_original>
